<compile_context>
chip_gen: v5e
topology: v5e:2x2
jax: 0.10.0
libtpu: 0.0.40
codegen_flags: <defaults>
</compile_context>

<pallas_src>
import jax
import jax.numpy as jnp
from jax.experimental import pallas as pl
from jax.experimental.pallas import tpu as pltpu

# ---------------------------------------------------------------------------
# Model hyper-parameters (consistent with the PyTorch module).
# ---------------------------------------------------------------------------
INPUT_DIM = 24        # df_encoded.shape[1]
LATENT_DIM = 10
H1 = 64
H2 = 32
LABEL_START_IDX = 20  # columns [LABEL_START_IDX:] get a sigmoid in decode()

# Feature-major slab layouts (rows = features on sublanes, cols = batch on lanes).
IN_ROWS = 40          # x(24) | eps(10) | pad(6)   -> multiple of 8
OUT_ROWS = 48         # recon(24) | mu(10) | logvar(10) | pad(4) -> multiple of 8
assert INPUT_DIM + LATENT_DIM <= IN_ROWS
assert INPUT_DIM + 2 * LATENT_DIM <= OUT_ROWS

BATCH = 1024          # demo batch (tiny in bytes)


def _vae_kernel(in_ref, mask_ref,
                w1_ref, b1_ref, w2_ref, b2_ref, w3_ref, b3_ref,
                w4_ref, b4_ref, w5_ref, b5_ref, w6_ref, b6_ref,
                out_ref):
    f32 = jnp.float32
    bf16 = jnp.bfloat16

    # Feature-major inputs: x^T [24, Bt], eps^T [10, Bt].
    xT = in_ref[0:INPUT_DIM, :].astype(bf16)
    epsT = in_ref[INPUT_DIM:INPUT_DIM + LATENT_DIM, :]           # f32

    def mm(w_ref, h_bf16):
        # y^T = W @ h^T : [out, in] @ [in, Bt] -> [out, Bt], f32 accumulate on MXU.
        return jnp.dot(w_ref[...], h_bf16, preferred_element_type=f32)

    # ---- encode ----
    h1 = jnp.maximum(mm(w1_ref, xT) + b1_ref[...], 0.0)                    # [64, Bt]
    h2 = jnp.maximum(mm(w2_ref, h1.astype(bf16)) + b2_ref[...], 0.0)       # [32, Bt]
    # fused fc31+fc32: one [2*LATENT_DIM, H2] matmul (mu rows first)
    ml = mm(w3_ref, h2.astype(bf16)) + b3_ref[...]                         # [20, Bt]
    mu = ml[0:LATENT_DIM, :]
    logvar = ml[LATENT_DIM:2 * LATENT_DIM, :]

    # ---- reparameterize: z = mu + eps * exp(0.5 * logvar)  (f32) ----
    z = mu + epsT * jnp.exp(0.5 * logvar)                                  # [10, Bt]

    # ---- decode ----
    h4 = jnp.maximum(mm(w4_ref, z.astype(bf16)) + b4_ref[...], 0.0)        # [32, Bt]
    h5 = jnp.maximum(mm(w5_ref, h4.astype(bf16)) + b5_ref[...], 0.0)       # [64, Bt]
    out6 = mm(w6_ref, h5.astype(bf16)) + b6_ref[...]                       # [24, Bt]

    # sigmoid only on label rows (feature-major): precomputed {0,1} mask, blend.
    mask = mask_ref[...]                                                   # [24, 1]
    recon = out6 + mask * (jax.nn.sigmoid(out6) - out6)

    # Build the full output slab in registers and issue ONE dense store.
    pad = jnp.zeros((OUT_ROWS - INPUT_DIM - 2 * LATENT_DIM, recon.shape[1]), f32)
    out_ref[...] = jnp.concatenate([recon, ml, pad], axis=0)               # [48, Bt]


def _grid_dims(batch):
    """At most 2 grid steps (one per v7x TensorCore); lane tile multiple of 128."""
    n_steps = 2 if batch >= 2 * 128 else 1
    tile = -(-batch // n_steps)                 # ceil
    tile = ((tile + 127) // 128) * 128          # lane-dim multiple of 128
    return n_steps, tile


def vae_forward(x, eps, params):
    """x: [B, INPUT_DIM] f32, eps: [B, LATENT_DIM] f32.

    params: dict of (W, b) with PyTorch layout W: [out, in], b: [out, 1]; fc3 is the
    column-fused fc31/fc32 (mu rows first). Returns (recon, mu, logvar).
    """
    B = x.shape[0]
    n_steps, tile = _grid_dims(B)
    B_pad = n_steps * tile

    # One feature-major input slab [IN_ROWS, B_pad] = [ x^T | eps^T | zero pad ].
    xT = jnp.pad(x.T.astype(jnp.float32), ((0, 0), (0, B_pad - B)))
    epsT = jnp.pad(eps.T.astype(jnp.float32), ((0, 0), (0, B_pad - B)))
    row_pad = jnp.zeros((IN_ROWS - INPUT_DIM - LATENT_DIM, B_pad), jnp.float32)
    in_slab = jnp.concatenate([xT, epsT, row_pad], axis=0)

    (w1, b1), (w2, b2), (w3, b3), (w4, b4), (w5, b5), (w6, b6) = (
        params["fc1"], params["fc2"], params["fc3"],
        params["fc4"], params["fc5"], params["fc6"])

    bf16 = jnp.bfloat16
    ws = [w.astype(bf16) for w in (w1, w2, w3, w4, w5, w6)]      # MXU inputs in bf16
    bs = [b.astype(jnp.float32) for b in (b1, b2, b3, b4, b5, b6)]

    # {0,1} row mask: 1.0 on output rows (features) that receive the sigmoid.
    sig_mask = (jnp.arange(INPUT_DIM) >= LABEL_START_IDX).astype(jnp.float32)[:, None]

    slab_spec = pl.BlockSpec((IN_ROWS, tile), lambda i: (0, i))
    resident_spec = pl.BlockSpec(memory_space=pltpu.MemorySpace.VMEM)  # whole array
    in_specs = [slab_spec, resident_spec] + [resident_spec] * 12
    out_specs = pl.BlockSpec((OUT_ROWS, tile), lambda i: (0, i))
    out_shape = jax.ShapeDtypeStruct((OUT_ROWS, B_pad), jnp.float32)

    # Advisory cost estimate (lets XLA schedule the wrapper pad/transpose around us).
    matmul_macs = (INPUT_DIM * H1 + H1 * H2 + H2 * 2 * LATENT_DIM
                   + LATENT_DIM * H2 + H2 * H1 + H1 * INPUT_DIM)
    param_bytes = sum(int(w.size) * 2 for w in ws) + sum(int(b.size) * 4 for b in bs)
    cost = pl.CostEstimate(
        flops=2 * B_pad * matmul_macs,
        transcendentals=B_pad * (LATENT_DIM + (INPUT_DIM - LABEL_START_IDX)),
        bytes_accessed=(IN_ROWS + OUT_ROWS) * B_pad * 4 + param_bytes)

    slab = pl.pallas_call(
        _vae_kernel,
        out_shape=out_shape,
        grid_spec=pltpu.PrefetchScalarGridSpec(
            num_scalar_prefetch=0,
            grid=(n_steps,),
            in_specs=in_specs,
            out_specs=out_specs,
        ),
        compiler_params=pltpu.CompilerParams(
            dimension_semantics=("parallel",)),
        cost_estimate=cost,
    )(in_slab, sig_mask,
      ws[0], bs[0], ws[1], bs[1], ws[2], bs[2],
      ws[3], bs[3], ws[4], bs[4], ws[5], bs[5])

    recon = slab[0:INPUT_DIM, :B].T
    mu = slab[INPUT_DIM:INPUT_DIM + LATENT_DIM, :B].T
    logvar = slab[INPUT_DIM + LATENT_DIM:INPUT_DIM + 2 * LATENT_DIM, :B].T
    return recon, mu, logvar


def init_params(key):
    """Deterministic Linear params (PyTorch-style U(+-1/sqrt(fan_in)) init).

    Weight stored PyTorch-style as [out, in]; bias as [out, 1]. fc31/fc32 are fused
    row-wise into a single fc3 with out_features = 2*LATENT_DIM (mu rows first).
    """
    def linear(key, fan_in, fan_out):
        kw, kb = jax.random.split(key)
        bound = 1.0 / jnp.sqrt(fan_in)
        w = jax.random.uniform(kw, (fan_out, fan_in), jnp.float32, -bound, bound)
        b = jax.random.uniform(kb, (fan_out, 1), jnp.float32, -bound, bound)
        return w, b

    keys = jax.random.split(key, 7)
    w31, b31 = linear(keys[2], H2, LATENT_DIM)
    w32, b32 = linear(keys[3], H2, LATENT_DIM)
    return {
        "fc1": linear(keys[0], INPUT_DIM, H1),
        "fc2": linear(keys[1], H1, H2),
        "fc3": (jnp.concatenate([w31, w32], axis=0),
                jnp.concatenate([b31, b32], axis=0)),
        "fc4": linear(keys[4], LATENT_DIM, H2),
        "fc5": linear(keys[5], H2, H1),
        "fc6": linear(keys[6], H1, INPUT_DIM),
    }


def vae_forward_ref(x, eps, params):
    """Pure-JAX f32 reference of the PyTorch forward (for sanity checking)."""
    def lin(h, p):
        w, b = p                     # w: [out, in], b: [out, 1]
        return h @ w.T + b[:, 0]
    h1 = jax.nn.relu(lin(x, params["fc1"]))
    h2 = jax.nn.relu(lin(h1, params["fc2"]))
    ml = lin(h2, params["fc3"])
    mu, logvar = ml[:, :LATENT_DIM], ml[:, LATENT_DIM:]
    z = mu + eps * jnp.exp(0.5 * logvar)
    h4 = jax.nn.relu(lin(z, params["fc4"]))
    h5 = jax.nn.relu(lin(h4, params["fc5"]))
    out = lin(h5, params["fc6"])
    recon = jnp.concatenate(
        [out[:, :LABEL_START_IDX], jax.nn.sigmoid(out[:, LABEL_START_IDX:])], axis=1)
    return recon, mu, logvar


if __name__ == "__main__":
    key = jax.random.PRNGKey(0)
    k_params, k_x, k_eps = jax.random.split(key, 3)

    params = init_params(k_params)
    x = jax.random.normal(k_x, (BATCH, INPUT_DIM), jnp.float32)
    # TODO(synk): torch.randn_like lives inside the module; here the noise is drawn
    # outside the kernel with jax.random and passed in for determinism.
    eps = jax.random.normal(k_eps, (BATCH, LATENT_DIM), jnp.float32)

    fwd = jax.jit(vae_forward)
    recon, mu, logvar = fwd(x, eps, params)
    jax.block_until_ready((recon, mu, logvar))

    # correctness check against pure-JAX f32 reference (tolerance relaxed for bf16 MXU)
    r_ref, mu_ref, lv_ref = vae_forward_ref(x, eps, params)
    assert recon.shape == (BATCH, INPUT_DIM)
    assert mu.shape == (BATCH, LATENT_DIM) and logvar.shape == (BATCH, LATENT_DIM)
    assert jnp.allclose(recon, r_ref, atol=5e-2, rtol=5e-2)
    assert jnp.allclose(mu, mu_ref, atol=5e-2, rtol=5e-2)
    assert jnp.allclose(logvar, lv_ref, atol=5e-2, rtol=5e-2)

    print("KERNEL_OK")
</pallas_src>

<mosaic_0001>
module attributes {stable_mosaic.version = 11 : i64} {
  func.func @_vae_kernel(%arg0: i32, %arg1: memref<40x512xf32, #tpu.memory_space<vmem>>, %arg2: memref<24x1xf32, #tpu.memory_space<vmem>>, %arg3: memref<64x24xbf16, #tpu.memory_space<vmem>>, %arg4: memref<64x1xf32, #tpu.memory_space<vmem>>, %arg5: memref<32x64xbf16, #tpu.memory_space<vmem>>, %arg6: memref<32x1xf32, #tpu.memory_space<vmem>>, %arg7: memref<20x32xbf16, #tpu.memory_space<vmem>>, %arg8: memref<20x1xf32, #tpu.memory_space<vmem>>, %arg9: memref<32x10xbf16, #tpu.memory_space<vmem>>, %arg10: memref<32x1xf32, #tpu.memory_space<vmem>>, %arg11: memref<64x32xbf16, #tpu.memory_space<vmem>>, %arg12: memref<64x1xf32, #tpu.memory_space<vmem>>, %arg13: memref<24x64xbf16, #tpu.memory_space<vmem>>, %arg14: memref<24x1xf32, #tpu.memory_space<vmem>>, %arg15: memref<48x512xf32, #tpu.memory_space<vmem>>) attributes {dimension_semantics = [#tpu.dimension_semantics<parallel>], iteration_bounds = array<i64: 2>, scalar_prefetch = 0 : i64, scratch_operands = 0 : i64, tpu.core_type = #tpu.core_type<tc>, window_params = [{transform_indices = @transform_0, window_bounds = array<i64: 40, 512>}, {pipeline_mode = #tpu.pipeline_mode<synchronous>, transform_indices = @transform_1, window_bounds = array<i64: 24, 1>}, {pipeline_mode = #tpu.pipeline_mode<synchronous>, transform_indices = @transform_2, window_bounds = array<i64: 64, 24>}, {pipeline_mode = #tpu.pipeline_mode<synchronous>, transform_indices = @transform_3, window_bounds = array<i64: 64, 1>}, {pipeline_mode = #tpu.pipeline_mode<synchronous>, transform_indices = @transform_4, window_bounds = array<i64: 32, 64>}, {pipeline_mode = #tpu.pipeline_mode<synchronous>, transform_indices = @transform_5, window_bounds = array<i64: 32, 1>}, {pipeline_mode = #tpu.pipeline_mode<synchronous>, transform_indices = @transform_6, window_bounds = array<i64: 20, 32>}, {pipeline_mode = #tpu.pipeline_mode<synchronous>, transform_indices = @transform_7, window_bounds = array<i64: 20, 1>}, {pipeline_mode = #tpu.pipeline_mode<synchronous>, transform_indices = @transform_8, window_bounds = array<i64: 32, 10>}, {pipeline_mode = #tpu.pipeline_mode<synchronous>, transform_indices = @transform_9, window_bounds = array<i64: 32, 1>}, {pipeline_mode = #tpu.pipeline_mode<synchronous>, transform_indices = @transform_10, window_bounds = array<i64: 64, 32>}, {pipeline_mode = #tpu.pipeline_mode<synchronous>, transform_indices = @transform_11, window_bounds = array<i64: 64, 1>}, {pipeline_mode = #tpu.pipeline_mode<synchronous>, transform_indices = @transform_12, window_bounds = array<i64: 24, 64>}, {pipeline_mode = #tpu.pipeline_mode<synchronous>, transform_indices = @transform_13, window_bounds = array<i64: 24, 1>}, {transform_indices = @transform_14, window_bounds = array<i64: 48, 512>}]} {
    %c0 = arith.constant 0 : index
    %c0_0 = arith.constant 0 : index
    %0 = vector.load %arg1[%c0, %c0_0] : memref<40x512xf32, #tpu.memory_space<vmem>>, vector<24x512xf32>
    %1 = arith.truncf %0 : vector<24x512xf32> to vector<24x512xbf16>
    %c24 = arith.constant 24 : index
    %c0_1 = arith.constant 0 : index
    %2 = vector.load %arg1[%c24, %c0_1] : memref<40x512xf32, #tpu.memory_space<vmem>>, vector<10x512xf32>
    %c0_2 = arith.constant 0 : index
    %c0_3 = arith.constant 0 : index
    %3 = vector.load %arg3[%c0_2, %c0_3] : memref<64x24xbf16, #tpu.memory_space<vmem>>, vector<64x24xbf16>
    %cst = arith.constant dense<0.000000e+00> : vector<64x512xf32>
    %4 = tpu.matmul %3, %1, %cst {dimension_numbers = #tpu.dot_dimension_numbers<[1], [0], [0], [1], [0, 0, 1, 1], [], []>} : vector<64x24xbf16>, vector<24x512xbf16>, vector<64x512xf32> -> vector<64x512xf32>
    %c0_4 = arith.constant 0 : index
    %c0_5 = arith.constant 0 : index
    %5 = vector.load %arg4[%c0_4, %c0_5] : memref<64x1xf32, #tpu.memory_space<vmem>>, vector<64x1xf32>
    %6 = vector.broadcast %5 : vector<64x1xf32> to vector<64x512xf32>
    %7 = arith.addf %4, %6 : vector<64x512xf32>
    %cst_6 = arith.constant 0.000000e+00 : f32
    %8 = vector.broadcast %cst_6 : f32 to vector<64x512xf32>
    %9 = arith.maximumf %7, %8 : vector<64x512xf32>
    %10 = arith.truncf %9 : vector<64x512xf32> to vector<64x512xbf16>
    %c0_7 = arith.constant 0 : index
    %c0_8 = arith.constant 0 : index
    %11 = vector.load %arg5[%c0_7, %c0_8] : memref<32x64xbf16, #tpu.memory_space<vmem>>, vector<32x64xbf16>
    %cst_9 = arith.constant dense<0.000000e+00> : vector<32x512xf32>
    %12 = tpu.matmul %11, %10, %cst_9 {dimension_numbers = #tpu.dot_dimension_numbers<[1], [0], [0], [1], [0, 0, 1, 1], [], []>} : vector<32x64xbf16>, vector<64x512xbf16>, vector<32x512xf32> -> vector<32x512xf32>
    %c0_10 = arith.constant 0 : index
    %c0_11 = arith.constant 0 : index
    %13 = vector.load %arg6[%c0_10, %c0_11] : memref<32x1xf32, #tpu.memory_space<vmem>>, vector<32x1xf32>
    %14 = vector.broadcast %13 : vector<32x1xf32> to vector<32x512xf32>
    %15 = arith.addf %12, %14 : vector<32x512xf32>
    %cst_12 = arith.constant 0.000000e+00 : f32
    %16 = vector.broadcast %cst_12 : f32 to vector<32x512xf32>
    %17 = arith.maximumf %15, %16 : vector<32x512xf32>
    %18 = arith.truncf %17 : vector<32x512xf32> to vector<32x512xbf16>
    %c0_13 = arith.constant 0 : index
    %c0_14 = arith.constant 0 : index
    %19 = vector.load %arg7[%c0_13, %c0_14] : memref<20x32xbf16, #tpu.memory_space<vmem>>, vector<20x32xbf16>
    %cst_15 = arith.constant dense<0.000000e+00> : vector<20x512xf32>
    %20 = tpu.matmul %19, %18, %cst_15 {dimension_numbers = #tpu.dot_dimension_numbers<[1], [0], [0], [1], [0, 0, 1, 1], [], []>} : vector<20x32xbf16>, vector<32x512xbf16>, vector<20x512xf32> -> vector<20x512xf32>
    %c0_16 = arith.constant 0 : index
    %c0_17 = arith.constant 0 : index
    %21 = vector.load %arg8[%c0_16, %c0_17] : memref<20x1xf32, #tpu.memory_space<vmem>>, vector<20x1xf32>
    %22 = vector.broadcast %21 : vector<20x1xf32> to vector<20x512xf32>
    %23 = arith.addf %20, %22 : vector<20x512xf32>
    %24 = vector.extract_strided_slice %23 {offsets = [0, 0], sizes = [10, 512], strides = [1, 1]} : vector<20x512xf32> to vector<10x512xf32>
    %25 = vector.extract_strided_slice %23 {offsets = [10, 0], sizes = [10, 512], strides = [1, 1]} : vector<20x512xf32> to vector<10x512xf32>
    %cst_18 = arith.constant 5.000000e-01 : f32
    %26 = vector.broadcast %cst_18 : f32 to vector<10x512xf32>
    %27 = arith.mulf %26, %25 : vector<10x512xf32>
    %28 = math.exp %27 : vector<10x512xf32>
    %29 = arith.mulf %2, %28 : vector<10x512xf32>
    %30 = arith.addf %24, %29 : vector<10x512xf32>
    %31 = arith.truncf %30 : vector<10x512xf32> to vector<10x512xbf16>
    %c0_19 = arith.constant 0 : index
    %c0_20 = arith.constant 0 : index
    %32 = vector.load %arg9[%c0_19, %c0_20] : memref<32x10xbf16, #tpu.memory_space<vmem>>, vector<32x10xbf16>
    %cst_21 = arith.constant dense<0.000000e+00> : vector<32x512xf32>
    %33 = tpu.matmul %32, %31, %cst_21 {dimension_numbers = #tpu.dot_dimension_numbers<[1], [0], [0], [1], [0, 0, 1, 1], [], []>} : vector<32x10xbf16>, vector<10x512xbf16>, vector<32x512xf32> -> vector<32x512xf32>
    %c0_22 = arith.constant 0 : index
    %c0_23 = arith.constant 0 : index
    %34 = vector.load %arg10[%c0_22, %c0_23] : memref<32x1xf32, #tpu.memory_space<vmem>>, vector<32x1xf32>
    %35 = vector.broadcast %34 : vector<32x1xf32> to vector<32x512xf32>
    %36 = arith.addf %33, %35 : vector<32x512xf32>
    %cst_24 = arith.constant 0.000000e+00 : f32
    %37 = vector.broadcast %cst_24 : f32 to vector<32x512xf32>
    %38 = arith.maximumf %36, %37 : vector<32x512xf32>
    %39 = arith.truncf %38 : vector<32x512xf32> to vector<32x512xbf16>
    %c0_25 = arith.constant 0 : index
    %c0_26 = arith.constant 0 : index
    %40 = vector.load %arg11[%c0_25, %c0_26] : memref<64x32xbf16, #tpu.memory_space<vmem>>, vector<64x32xbf16>
    %cst_27 = arith.constant dense<0.000000e+00> : vector<64x512xf32>
    %41 = tpu.matmul %40, %39, %cst_27 {dimension_numbers = #tpu.dot_dimension_numbers<[1], [0], [0], [1], [0, 0, 1, 1], [], []>} : vector<64x32xbf16>, vector<32x512xbf16>, vector<64x512xf32> -> vector<64x512xf32>
    %c0_28 = arith.constant 0 : index
    %c0_29 = arith.constant 0 : index
    %42 = vector.load %arg12[%c0_28, %c0_29] : memref<64x1xf32, #tpu.memory_space<vmem>>, vector<64x1xf32>
    %43 = vector.broadcast %42 : vector<64x1xf32> to vector<64x512xf32>
    %44 = arith.addf %41, %43 : vector<64x512xf32>
    %cst_30 = arith.constant 0.000000e+00 : f32
    %45 = vector.broadcast %cst_30 : f32 to vector<64x512xf32>
    %46 = arith.maximumf %44, %45 : vector<64x512xf32>
    %47 = arith.truncf %46 : vector<64x512xf32> to vector<64x512xbf16>
    %c0_31 = arith.constant 0 : index
    %c0_32 = arith.constant 0 : index
    %48 = vector.load %arg13[%c0_31, %c0_32] : memref<24x64xbf16, #tpu.memory_space<vmem>>, vector<24x64xbf16>
    %cst_33 = arith.constant dense<0.000000e+00> : vector<24x512xf32>
    %49 = tpu.matmul %48, %47, %cst_33 {dimension_numbers = #tpu.dot_dimension_numbers<[1], [0], [0], [1], [0, 0, 1, 1], [], []>} : vector<24x64xbf16>, vector<64x512xbf16>, vector<24x512xf32> -> vector<24x512xf32>
    %c0_34 = arith.constant 0 : index
    %c0_35 = arith.constant 0 : index
    %50 = vector.load %arg14[%c0_34, %c0_35] : memref<24x1xf32, #tpu.memory_space<vmem>>, vector<24x1xf32>
    %51 = vector.broadcast %50 : vector<24x1xf32> to vector<24x512xf32>
    %52 = arith.addf %49, %51 : vector<24x512xf32>
    %c0_36 = arith.constant 0 : index
    %c0_37 = arith.constant 0 : index
    %53 = vector.load %arg2[%c0_36, %c0_37] : memref<24x1xf32, #tpu.memory_space<vmem>>, vector<24x1xf32>
    %54 = arith.negf %52 : vector<24x512xf32>
    %55 = math.exp %54 : vector<24x512xf32>
    %cst_38 = arith.constant 1.000000e+00 : f32
    %56 = vector.broadcast %cst_38 : f32 to vector<24x512xf32>
    %57 = arith.addf %56, %55 : vector<24x512xf32>
    %58 = arith.divf %56, %57 : vector<24x512xf32>
    %59 = arith.subf %58, %52 : vector<24x512xf32>
    %60 = vector.broadcast %53 : vector<24x1xf32> to vector<24x512xf32>
    %61 = arith.mulf %60, %59 : vector<24x512xf32>
    %62 = arith.addf %52, %61 : vector<24x512xf32>
    %cst_39 = arith.constant 0.000000e+00 : f32
    %63 = vector.broadcast %cst_39 : f32 to vector<4x512xf32>
    %64 = tpu.concatenate %62, %23, %63 in 0 : vector<24x512xf32>, vector<20x512xf32>, vector<4x512xf32> -> vector<48x512xf32>
    %c0_40 = arith.constant 0 : index
    %c0_41 = arith.constant 0 : index
    %65 = vector.load %arg15[%c0_40, %c0_41] : memref<48x512xf32, #tpu.memory_space<vmem>>, vector<48x512xf32>
    tpu.vector_store %arg15[%c0_40, %c0_41], %64 {strides = array<i32>} : memref<48x512xf32, #tpu.memory_space<vmem>>, vector<48x512xf32>,
    return
  }
  func.func @transform_0(%arg0: i32) -> (i32, i32) {
    %c0_i32 = arith.constant 0 : i32
    %c0_i32_0 = arith.constant 0 : i32
    return %c0_i32, %arg0 : i32, i32
  }
  func.func @transform_1(%arg0: i32) -> (i32, i32) {
    %c0_i32 = arith.constant 0 : i32
    %c0_i32_0 = arith.constant 0 : i32
    %c0_i32_1 = arith.constant 0 : i32
    return %c0_i32, %c0_i32_0 : i32, i32
  }
  func.func @transform_2(%arg0: i32) -> (i32, i32) {
    %c0_i32 = arith.constant 0 : i32
    %c0_i32_0 = arith.constant 0 : i32
    %c0_i32_1 = arith.constant 0 : i32
    return %c0_i32, %c0_i32_0 : i32, i32
  }
  func.func @transform_3(%arg0: i32) -> (i32, i32) {
    %c0_i32 = arith.constant 0 : i32
    %c0_i32_0 = arith.constant 0 : i32
    %c0_i32_1 = arith.constant 0 : i32
    return %c0_i32, %c0_i32_0 : i32, i32
  }
  func.func @transform_4(%arg0: i32) -> (i32, i32) {
    %c0_i32 = arith.constant 0 : i32
    %c0_i32_0 = arith.constant 0 : i32
    %c0_i32_1 = arith.constant 0 : i32
    return %c0_i32, %c0_i32_0 : i32, i32
  }
  func.func @transform_5(%arg0: i32) -> (i32, i32) {
    %c0_i32 = arith.constant 0 : i32
    %c0_i32_0 = arith.constant 0 : i32
    %c0_i32_1 = arith.constant 0 : i32
    return %c0_i32, %c0_i32_0 : i32, i32
  }
  func.func @transform_6(%arg0: i32) -> (i32, i32) {
    %c0_i32 = arith.constant 0 : i32
    %c0_i32_0 = arith.constant 0 : i32
    %c0_i32_1 = arith.constant 0 : i32
    return %c0_i32, %c0_i32_0 : i32, i32
  }
  func.func @transform_7(%arg0: i32) -> (i32, i32) {
    %c0_i32 = arith.constant 0 : i32
    %c0_i32_0 = arith.constant 0 : i32
    %c0_i32_1 = arith.constant 0 : i32
    return %c0_i32, %c0_i32_0 : i32, i32
  }
  func.func @transform_8(%arg0: i32) -> (i32, i32) {
    %c0_i32 = arith.constant 0 : i32
    %c0_i32_0 = arith.constant 0 : i32
    %c0_i32_1 = arith.constant 0 : i32
    return %c0_i32, %c0_i32_0 : i32, i32
  }
  func.func @transform_9(%arg0: i32) -> (i32, i32) {
    %c0_i32 = arith.constant 0 : i32
    %c0_i32_0 = arith.constant 0 : i32
    %c0_i32_1 = arith.constant 0 : i32
    return %c0_i32, %c0_i32_0 : i32, i32
  }
  func.func @transform_10(%arg0: i32) -> (i32, i32) {
    %c0_i32 = arith.constant 0 : i32
    %c0_i32_0 = arith.constant 0 : i32
    %c0_i32_1 = arith.constant 0 : i32
    return %c0_i32, %c0_i32_0 : i32, i32
  }
  func.func @transform_11(%arg0: i32) -> (i32, i32) {
    %c0_i32 = arith.constant 0 : i32
    %c0_i32_0 = arith.constant 0 : i32
    %c0_i32_1 = arith.constant 0 : i32
    return %c0_i32, %c0_i32_0 : i32, i32
  }
  func.func @transform_12(%arg0: i32) -> (i32, i32) {
    %c0_i32 = arith.constant 0 : i32
    %c0_i32_0 = arith.constant 0 : i32
    %c0_i32_1 = arith.constant 0 : i32
    return %c0_i32, %c0_i32_0 : i32, i32
  }
  func.func @transform_13(%arg0: i32) -> (i32, i32) {
    %c0_i32 = arith.constant 0 : i32
    %c0_i32_0 = arith.constant 0 : i32
    %c0_i32_1 = arith.constant 0 : i32
    return %c0_i32, %c0_i32_0 : i32, i32
  }
  func.func @transform_14(%arg0: i32) -> (i32, i32) {
    %c0_i32 = arith.constant 0 : i32
    %c0_i32_0 = arith.constant 0 : i32
    return %c0_i32, %arg0 : i32, i32
  }
}

</mosaic_0001>

<llo_original>
// kernel: vae_forward.1
$region0: #{vae_forward.1}
  #allocation0 [shape = 'u32[]', space=smem, size = 0x4, offset = 0x4, fixed_abs, tag = 'smem constant byte address 0x4 - core index']
  #allocation1 [shape = 'u32[72,128]{1,0:T(1,128)}', space=vmem, size = 0x9000, scoped, tag = 'internal scratch']
  %s0 = inlined_call_operand.vmem [shape: f32[40,1024], index: 0, kind: input, shape index: {}]
  %s1 = inlined_call_operand.vmem [shape: f32[24,1], index: 1, kind: input, shape index: {}]
  %s2 = inlined_call_operand.vmem [shape: bf16[64,24], index: 2, kind: input, shape index: {}]
  %s3 = inlined_call_operand.vmem [shape: f32[64,1], index: 3, kind: input, shape index: {}]
  %s4 = inlined_call_operand.vmem [shape: bf16[32,64], index: 4, kind: input, shape index: {}]
  %s5 = inlined_call_operand.vmem [shape: f32[32,1], index: 5, kind: input, shape index: {}]
  %s6 = inlined_call_operand.vmem [shape: bf16[20,32], index: 6, kind: input, shape index: {}]
  %s7 = inlined_call_operand.vmem [shape: f32[20,1], index: 7, kind: input, shape index: {}]
  %s8 = inlined_call_operand.vmem [shape: bf16[32,10], index: 8, kind: input, shape index: {}]
  %s9 = inlined_call_operand.vmem [shape: f32[32,1], index: 9, kind: input, shape index: {}]
  %s10 = inlined_call_operand.vmem [shape: bf16[64,32], index: 10, kind: input, shape index: {}]
  %s11 = inlined_call_operand.vmem [shape: f32[64,1], index: 11, kind: input, shape index: {}]
  %s12 = inlined_call_operand.vmem [shape: bf16[24,64], index: 12, kind: input, shape index: {}]
  %s13 = inlined_call_operand.vmem [shape: f32[24,1], index: 13, kind: input, shape index: {}]
  %s14 = inlined_call_operand.vmem [shape: f32[48,1024], index: 14, kind: output, shape index: {}]
  %s15 = sld [smem:[#allocation0]]
  $region131: #{vae_forward.1} parent=0
    _
  %s17 = ssub.s32 1, %s15
  %s18 = scalar_select 0, %s17, %s15
  $region1: #{vae_forward.1} parent=0
    #allocation2 [shape = 'u8[163840]{0}', space=vmem, size = 0x28000, scoped, tag = 'input window, operand 0']
    #allocation3 [shape = 'u8[196608]{0}', space=vmem, size = 0x30000, scoped, tag = 'output window, operand 0']
    loop: start=0, step=1, limit=4
    $region2: #{vae_forward.1} parent=1 // loop_pre_header
      _
    $region3: #{vae_forward.1} parent=1 // loop_header
      %s20 = sphi 0, %s24
      %p21 = scmp.ge.s32.totalorder %s20, 4
      %s30 = sphi 0, %s32
      %s33 = sphi 0, %s30
      %s34 = sphi 0, %s33
      %s50 = sphi 0, %s34
      %s54 = sphi 0, %s54
      %s56 = sphi 0, %s54
      %s57 = sphi 0, %s56
      %s71 = sphi 0, %s57
      %s75 = sphi 0, %s75
      %s77 = sphi 0, %s75
      %s78 = sphi 0, %s77
      %s92 = sphi 0, %s78
      %s96 = sphi 0, %s96
      %s98 = sphi 0, %s96
      %s99 = sphi 0, %s98
      %s113 = sphi 0, %s99
      %s117 = sphi 0, %s117
      %s119 = sphi 0, %s117
      %s120 = sphi 0, %s119
      %s134 = sphi 0, %s120
      %s138 = sphi 0, %s138
      %s140 = sphi 0, %s138
      %s141 = sphi 0, %s140
      %s155 = sphi 0, %s141
      %s159 = sphi 0, %s159
      %s161 = sphi 0, %s159
      %s162 = sphi 0, %s161
      %s176 = sphi 0, %s162
      %s180 = sphi 0, %s180
      %s182 = sphi 0, %s180
      %s183 = sphi 0, %s182
      %s197 = sphi 0, %s183
      %s201 = sphi 0, %s201
      %s203 = sphi 0, %s201
      %s204 = sphi 0, %s203
      %s218 = sphi 0, %s204
      %s222 = sphi 0, %s222
      %s224 = sphi 0, %s222
      %s225 = sphi 0, %s224
      %s239 = sphi 0, %s225
      %s243 = sphi 0, %s243
      %s245 = sphi 0, %s243
      %s246 = sphi 0, %s245
      %s260 = sphi 0, %s246
      %s264 = sphi 0, %s264
      %s266 = sphi 0, %s264
      %s267 = sphi 0, %s266
      %s281 = sphi 0, %s267
      %s285 = sphi 0, %s285
      %s287 = sphi 0, %s285
      %s288 = sphi 0, %s287
      %s302 = sphi 0, %s288
      %s306 = sphi 0, %s306
      %s308 = sphi 0, %s306
      %s309 = sphi 0, %s308
      %s323 = sphi 0, %s309
      %s329 = sphi 0, %s331
      %s332 = sphi 0, %s329
      %s333 = sphi 0, %s332
      %s349 = sphi 0, %s333
    $region4: #{vae_forward.1} parent=1 // loop_header_branch
      %23 = sbr.rel (%p21) target = $region8
    $region5: #{vae_forward.1} parent=1 // loop_body
      %s25 = ssub.s32 %s20, 1
      %s26 = ssub.s32 %s20, 2
      %s27 = sadd.s32 %s20, 1
      %s28 = ssub.s32 %s20, %s27
      %p29 = scmp.eq.s32.totalorder %s28, 0
      %s31 = sadd.s32 %s30, 1
      %s32 = scalar_select %p29, %s30, %s31
      %p35 = pneg %p29
      %p36 = scmp.eq.s32.totalorder %s20, 1
      %p37 = por %p35, %p36
      %p38 = scmp.ne.s32.totalorder %s30, %s33
      %p39 = scmp.eq.s32.totalorder %s20, 0
      %p40 = por %p38, %p39
      %p41 = scmp.ne.s32.totalorder %s30, %s33
      %p42 = scmp.eq.s32.totalorder %s25, 1
      %p43 = por %p41, %p42
      %p44 = scmp.ne.s32.totalorder %s33, %s34
      %p45 = scmp.eq.s32.totalorder %s25, 0
      %p46 = por %p44, %p45
      %p47 = scmp.ne.s32.totalorder %s33, %s34
      %p48 = scmp.eq.s32.totalorder %s26, 1
      %p49 = por %p47, %p48
      %p51 = scmp.ne.s32.totalorder %s34, %s50
      %p52 = scmp.eq.s32.totalorder %s26, 0
      %p53 = por %p51, %p52
      %s55 = sadd.s32 %s54, 1
      %p58 = scmp.eq.s32.totalorder %s20, 1
      %p59 = scmp.ne.s32.totalorder %s54, %s56
      %p60 = scmp.eq.s32.totalorder %s20, 0
      %p61 = por %p59, %p60
      %p62 = scmp.ne.s32.totalorder %s54, %s56
      %p63 = scmp.eq.s32.totalorder %s25, 1
      %p64 = por %p62, %p63
      %p65 = scmp.ne.s32.totalorder %s56, %s57
      %p66 = scmp.eq.s32.totalorder %s25, 0
      %p67 = por %p65, %p66
      %p68 = scmp.ne.s32.totalorder %s56, %s57
      %p69 = scmp.eq.s32.totalorder %s26, 1
      %p70 = por %p68, %p69
      %p72 = scmp.ne.s32.totalorder %s57, %s71
      %p73 = scmp.eq.s32.totalorder %s26, 0
      %p74 = por %p72, %p73
      %s76 = sadd.s32 %s75, 1
      %p79 = scmp.eq.s32.totalorder %s20, 1
      %p80 = scmp.ne.s32.totalorder %s75, %s77
      %p81 = scmp.eq.s32.totalorder %s20, 0
      %p82 = por %p80, %p81
      %p83 = scmp.ne.s32.totalorder %s75, %s77
      %p84 = scmp.eq.s32.totalorder %s25, 1
      %p85 = por %p83, %p84
      %p86 = scmp.ne.s32.totalorder %s77, %s78
      %p87 = scmp.eq.s32.totalorder %s25, 0
      %p88 = por %p86, %p87
      %p89 = scmp.ne.s32.totalorder %s77, %s78
      %p90 = scmp.eq.s32.totalorder %s26, 1
      %p91 = por %p89, %p90
      %p93 = scmp.ne.s32.totalorder %s78, %s92
      %p94 = scmp.eq.s32.totalorder %s26, 0
      %p95 = por %p93, %p94
      %s97 = sadd.s32 %s96, 1
      %p100 = scmp.eq.s32.totalorder %s20, 1
      %p101 = scmp.ne.s32.totalorder %s96, %s98
      %p102 = scmp.eq.s32.totalorder %s20, 0
      %p103 = por %p101, %p102
      %p104 = scmp.ne.s32.totalorder %s96, %s98
      %p105 = scmp.eq.s32.totalorder %s25, 1
      %p106 = por %p104, %p105
      %p107 = scmp.ne.s32.totalorder %s98, %s99
      %p108 = scmp.eq.s32.totalorder %s25, 0
      %p109 = por %p107, %p108
      %p110 = scmp.ne.s32.totalorder %s98, %s99
      %p111 = scmp.eq.s32.totalorder %s26, 1
      %p112 = por %p110, %p111
      %p114 = scmp.ne.s32.totalorder %s99, %s113
      %p115 = scmp.eq.s32.totalorder %s26, 0
      %p116 = por %p114, %p115
      %s118 = sadd.s32 %s117, 1
      %p121 = scmp.eq.s32.totalorder %s20, 1
      %p122 = scmp.ne.s32.totalorder %s117, %s119
      %p123 = scmp.eq.s32.totalorder %s20, 0
      %p124 = por %p122, %p123
      %p125 = scmp.ne.s32.totalorder %s117, %s119
      %p126 = scmp.eq.s32.totalorder %s25, 1
      %p127 = por %p125, %p126
      %p128 = scmp.ne.s32.totalorder %s119, %s120
      %p129 = scmp.eq.s32.totalorder %s25, 0
      %p130 = por %p128, %p129
      %p131 = scmp.ne.s32.totalorder %s119, %s120
      %p132 = scmp.eq.s32.totalorder %s26, 1
      %p133 = por %p131, %p132
      %p135 = scmp.ne.s32.totalorder %s120, %s134
      %p136 = scmp.eq.s32.totalorder %s26, 0
      %p137 = por %p135, %p136
      %s139 = sadd.s32 %s138, 1
      %p142 = scmp.eq.s32.totalorder %s20, 1
      %p143 = scmp.ne.s32.totalorder %s138, %s140
      %p144 = scmp.eq.s32.totalorder %s20, 0
      %p145 = por %p143, %p144
      %p146 = scmp.ne.s32.totalorder %s138, %s140
      %p147 = scmp.eq.s32.totalorder %s25, 1
      %p148 = por %p146, %p147
      %p149 = scmp.ne.s32.totalorder %s140, %s141
      %p150 = scmp.eq.s32.totalorder %s25, 0
      %p151 = por %p149, %p150
      %p152 = scmp.ne.s32.totalorder %s140, %s141
      %p153 = scmp.eq.s32.totalorder %s26, 1
      %p154 = por %p152, %p153
      %p156 = scmp.ne.s32.totalorder %s141, %s155
      %p157 = scmp.eq.s32.totalorder %s26, 0
      %p158 = por %p156, %p157
      %s160 = sadd.s32 %s159, 1
      %p163 = scmp.eq.s32.totalorder %s20, 1
      %p164 = scmp.ne.s32.totalorder %s159, %s161
      %p165 = scmp.eq.s32.totalorder %s20, 0
      %p166 = por %p164, %p165
      %p167 = scmp.ne.s32.totalorder %s159, %s161
      %p168 = scmp.eq.s32.totalorder %s25, 1
      %p169 = por %p167, %p168
      %p170 = scmp.ne.s32.totalorder %s161, %s162
      %p171 = scmp.eq.s32.totalorder %s25, 0
      %p172 = por %p170, %p171
      %p173 = scmp.ne.s32.totalorder %s161, %s162
      %p174 = scmp.eq.s32.totalorder %s26, 1
      %p175 = por %p173, %p174
      %p177 = scmp.ne.s32.totalorder %s162, %s176
      %p178 = scmp.eq.s32.totalorder %s26, 0
      %p179 = por %p177, %p178
      %s181 = sadd.s32 %s180, 1
      %p184 = scmp.eq.s32.totalorder %s20, 1
      %p185 = scmp.ne.s32.totalorder %s180, %s182
      %p186 = scmp.eq.s32.totalorder %s20, 0
      %p187 = por %p185, %p186
      %p188 = scmp.ne.s32.totalorder %s180, %s182
      %p189 = scmp.eq.s32.totalorder %s25, 1
      %p190 = por %p188, %p189
      %p191 = scmp.ne.s32.totalorder %s182, %s183
      %p192 = scmp.eq.s32.totalorder %s25, 0
      %p193 = por %p191, %p192
      %p194 = scmp.ne.s32.totalorder %s182, %s183
      %p195 = scmp.eq.s32.totalorder %s26, 1
      %p196 = por %p194, %p195
      %p198 = scmp.ne.s32.totalorder %s183, %s197
      %p199 = scmp.eq.s32.totalorder %s26, 0
      %p200 = por %p198, %p199
      %s202 = sadd.s32 %s201, 1
      %p205 = scmp.eq.s32.totalorder %s20, 1
      %p206 = scmp.ne.s32.totalorder %s201, %s203
      %p207 = scmp.eq.s32.totalorder %s20, 0
      %p208 = por %p206, %p207
      %p209 = scmp.ne.s32.totalorder %s201, %s203
      %p210 = scmp.eq.s32.totalorder %s25, 1
      %p211 = por %p209, %p210
      %p212 = scmp.ne.s32.totalorder %s203, %s204
      %p213 = scmp.eq.s32.totalorder %s25, 0
      %p214 = por %p212, %p213
      %p215 = scmp.ne.s32.totalorder %s203, %s204
      %p216 = scmp.eq.s32.totalorder %s26, 1
      %p217 = por %p215, %p216
      %p219 = scmp.ne.s32.totalorder %s204, %s218
      %p220 = scmp.eq.s32.totalorder %s26, 0
      %p221 = por %p219, %p220
      %s223 = sadd.s32 %s222, 1
      %p226 = scmp.eq.s32.totalorder %s20, 1
      %p227 = scmp.ne.s32.totalorder %s222, %s224
      %p228 = scmp.eq.s32.totalorder %s20, 0
      %p229 = por %p227, %p228
      %p230 = scmp.ne.s32.totalorder %s222, %s224
      %p231 = scmp.eq.s32.totalorder %s25, 1
      %p232 = por %p230, %p231
      %p233 = scmp.ne.s32.totalorder %s224, %s225
      %p234 = scmp.eq.s32.totalorder %s25, 0
      %p235 = por %p233, %p234
      %p236 = scmp.ne.s32.totalorder %s224, %s225
      %p237 = scmp.eq.s32.totalorder %s26, 1
      %p238 = por %p236, %p237
      %p240 = scmp.ne.s32.totalorder %s225, %s239
      %p241 = scmp.eq.s32.totalorder %s26, 0
      %p242 = por %p240, %p241
      %s244 = sadd.s32 %s243, 1
      %p247 = scmp.eq.s32.totalorder %s20, 1
      %p248 = scmp.ne.s32.totalorder %s243, %s245
      %p249 = scmp.eq.s32.totalorder %s20, 0
      %p250 = por %p248, %p249
      %p251 = scmp.ne.s32.totalorder %s243, %s245
      %p252 = scmp.eq.s32.totalorder %s25, 1
      %p253 = por %p251, %p252
      %p254 = scmp.ne.s32.totalorder %s245, %s246
      %p255 = scmp.eq.s32.totalorder %s25, 0
      %p256 = por %p254, %p255
      %p257 = scmp.ne.s32.totalorder %s245, %s246
      %p258 = scmp.eq.s32.totalorder %s26, 1
      %p259 = por %p257, %p258
      %p261 = scmp.ne.s32.totalorder %s246, %s260
      %p262 = scmp.eq.s32.totalorder %s26, 0
      %p263 = por %p261, %p262
      %s265 = sadd.s32 %s264, 1
      %p268 = scmp.eq.s32.totalorder %s20, 1
      %p269 = scmp.ne.s32.totalorder %s264, %s266
      %p270 = scmp.eq.s32.totalorder %s20, 0
      %p271 = por %p269, %p270
      %p272 = scmp.ne.s32.totalorder %s264, %s266
      %p273 = scmp.eq.s32.totalorder %s25, 1
      %p274 = por %p272, %p273
      %p275 = scmp.ne.s32.totalorder %s266, %s267
      %p276 = scmp.eq.s32.totalorder %s25, 0
      %p277 = por %p275, %p276
      %p278 = scmp.ne.s32.totalorder %s266, %s267
      %p279 = scmp.eq.s32.totalorder %s26, 1
      %p280 = por %p278, %p279
      %p282 = scmp.ne.s32.totalorder %s267, %s281
      %p283 = scmp.eq.s32.totalorder %s26, 0
      %p284 = por %p282, %p283
      %s286 = sadd.s32 %s285, 1
      %p289 = scmp.eq.s32.totalorder %s20, 1
      %p290 = scmp.ne.s32.totalorder %s285, %s287
      %p291 = scmp.eq.s32.totalorder %s20, 0
      %p292 = por %p290, %p291
      %p293 = scmp.ne.s32.totalorder %s285, %s287
      %p294 = scmp.eq.s32.totalorder %s25, 1
      %p295 = por %p293, %p294
      %p296 = scmp.ne.s32.totalorder %s287, %s288
      %p297 = scmp.eq.s32.totalorder %s25, 0
      %p298 = por %p296, %p297
      %p299 = scmp.ne.s32.totalorder %s287, %s288
      %p300 = scmp.eq.s32.totalorder %s26, 1
      %p301 = por %p299, %p300
      %p303 = scmp.ne.s32.totalorder %s288, %s302
      %p304 = scmp.eq.s32.totalorder %s26, 0
      %p305 = por %p303, %p304
      %s307 = sadd.s32 %s306, 1
      %p310 = scmp.eq.s32.totalorder %s20, 1
      %p311 = scmp.ne.s32.totalorder %s306, %s308
      %p312 = scmp.eq.s32.totalorder %s20, 0
      %p313 = por %p311, %p312
      %p314 = scmp.ne.s32.totalorder %s306, %s308
      %p315 = scmp.eq.s32.totalorder %s25, 1
      %p316 = por %p314, %p315
      %p317 = scmp.ne.s32.totalorder %s308, %s309
      %p318 = scmp.eq.s32.totalorder %s25, 0
      %p319 = por %p317, %p318
      %p320 = scmp.ne.s32.totalorder %s308, %s309
      %p321 = scmp.eq.s32.totalorder %s26, 1
      %p322 = por %p320, %p321
      %p324 = scmp.ne.s32.totalorder %s309, %s323
      %p325 = scmp.eq.s32.totalorder %s26, 0
      %p326 = por %p324, %p325
      %s327 = ssub.s32 %s20, %s27
      %p328 = scmp.eq.s32.totalorder %s327, 0
      %s330 = sadd.s32 %s329, 1
      %s331 = scalar_select %p328, %s329, %s330
      %p334 = pneg %p328
      %p335 = scmp.eq.s32.totalorder %s20, 1
      %p336 = por %p334, %p335
      %p337 = scmp.ne.s32.totalorder %s329, %s332
      %p338 = scmp.eq.s32.totalorder %s20, 0
      %p339 = por %p337, %p338
      %p340 = scmp.ne.s32.totalorder %s329, %s332
      %p341 = scmp.eq.s32.totalorder %s25, 1
      %p342 = por %p340, %p341
      %p343 = scmp.ne.s32.totalorder %s332, %s333
      %p344 = scmp.eq.s32.totalorder %s25, 0
      %p345 = por %p343, %p344
      %p346 = scmp.ne.s32.totalorder %s332, %s333
      %p347 = scmp.eq.s32.totalorder %s26, 1
      %p348 = por %p346, %p347
      %p350 = scmp.ne.s32.totalorder %s333, %s349
      %p351 = scmp.eq.s32.totalorder %s26, 0
      %p352 = por %p350, %p351
      %p353 = scmp.le.s32.totalorder 1, %s20
      %p354 = scmp.lt.s32.totalorder %s20, 3
      %p355 = pnand %p353, %p354
      %p356 = pneg %p355
      // Predicated region
      $region9: #{vae_forward.1} parent=5 // pred_check
        _
      $region10: #{vae_forward.1} parent=5 // pred_check_branch
        %358 = sbr.rel (%p355) target = $region12
      $region11: #{vae_forward.1} parent=5 // pred_region
        %s359 = ssub.s32 %s20, 1
        // Predicated region
        $region13: #{vae_forward.1} parent=11 // pred_check
          %p360 = pneg %p67
        $region14: #{vae_forward.1} parent=11 // pred_check_branch
          %362 = sbr.rel (%p360) target = $region16
        $region15: #{vae_forward.1} parent=11 // pred_region
          _
        $region16: #{vae_forward.1} parent=11 // pred_fallthru
          _
        // Predicated region
        $region17: #{vae_forward.1} parent=11 // pred_check
          %p363 = pneg %p88
        $region18: #{vae_forward.1} parent=11 // pred_check_branch
          %365 = sbr.rel (%p363) target = $region20
        $region19: #{vae_forward.1} parent=11 // pred_region
          _
        $region20: #{vae_forward.1} parent=11 // pred_fallthru
          _
        // Predicated region
        $region21: #{vae_forward.1} parent=11 // pred_check
          %p366 = pneg %p109
        $region22: #{vae_forward.1} parent=11 // pred_check_branch
          %368 = sbr.rel (%p366) target = $region24
        $region23: #{vae_forward.1} parent=11 // pred_region
          _
        $region24: #{vae_forward.1} parent=11 // pred_fallthru
          _
        // Predicated region
        $region25: #{vae_forward.1} parent=11 // pred_check
          %p369 = pneg %p130
        $region26: #{vae_forward.1} parent=11 // pred_check_branch
          %371 = sbr.rel (%p369) target = $region28
        $region27: #{vae_forward.1} parent=11 // pred_region
          _
        $region28: #{vae_forward.1} parent=11 // pred_fallthru
          _
        // Predicated region
        $region29: #{vae_forward.1} parent=11 // pred_check
          %p372 = pneg %p151
        $region30: #{vae_forward.1} parent=11 // pred_check_branch
          %374 = sbr.rel (%p372) target = $region32
        $region31: #{vae_forward.1} parent=11 // pred_region
          _
        $region32: #{vae_forward.1} parent=11 // pred_fallthru
          _
        // Predicated region
        $region33: #{vae_forward.1} parent=11 // pred_check
          %p375 = pneg %p172
        $region34: #{vae_forward.1} parent=11 // pred_check_branch
          %377 = sbr.rel (%p375) target = $region36
        $region35: #{vae_forward.1} parent=11 // pred_region
          _
        $region36: #{vae_forward.1} parent=11 // pred_fallthru
          _
        // Predicated region
        $region37: #{vae_forward.1} parent=11 // pred_check
          %p378 = pneg %p193
        $region38: #{vae_forward.1} parent=11 // pred_check_branch
          %380 = sbr.rel (%p378) target = $region40
        $region39: #{vae_forward.1} parent=11 // pred_region
          _
        $region40: #{vae_forward.1} parent=11 // pred_fallthru
          _
        // Predicated region
        $region41: #{vae_forward.1} parent=11 // pred_check
          %p381 = pneg %p214
        $region42: #{vae_forward.1} parent=11 // pred_check_branch
          %383 = sbr.rel (%p381) target = $region44
        $region43: #{vae_forward.1} parent=11 // pred_region
          _
        $region44: #{vae_forward.1} parent=11 // pred_fallthru
          _
        // Predicated region
        $region45: #{vae_forward.1} parent=11 // pred_check
          %p384 = pneg %p235
        $region46: #{vae_forward.1} parent=11 // pred_check_branch
          %386 = sbr.rel (%p384) target = $region48
        $region47: #{vae_forward.1} parent=11 // pred_region
          _
        $region48: #{vae_forward.1} parent=11 // pred_fallthru
          _
        // Predicated region
        $region49: #{vae_forward.1} parent=11 // pred_check
          %p387 = pneg %p256
        $region50: #{vae_forward.1} parent=11 // pred_check_branch
          %389 = sbr.rel (%p387) target = $region52
        $region51: #{vae_forward.1} parent=11 // pred_region
          _
        $region52: #{vae_forward.1} parent=11 // pred_fallthru
          _
        // Predicated region
        $region53: #{vae_forward.1} parent=11 // pred_check
          %p390 = pneg %p277
        $region54: #{vae_forward.1} parent=11 // pred_check_branch
          %392 = sbr.rel (%p390) target = $region56
        $region55: #{vae_forward.1} parent=11 // pred_region
          _
        $region56: #{vae_forward.1} parent=11 // pred_fallthru
          _
        // Predicated region
        $region57: #{vae_forward.1} parent=11 // pred_check
          %p393 = pneg %p298
        $region58: #{vae_forward.1} parent=11 // pred_check_branch
          %395 = sbr.rel (%p393) target = $region60
        $region59: #{vae_forward.1} parent=11 // pred_region
          _
        $region60: #{vae_forward.1} parent=11 // pred_fallthru
          _
        // Predicated region
        $region61: #{vae_forward.1} parent=11 // pred_check
          %p396 = pneg %p319
        $region62: #{vae_forward.1} parent=11 // pred_check_branch
          %398 = sbr.rel (%p396) target = $region64
        $region63: #{vae_forward.1} parent=11 // pred_region
          _
        $region64: #{vae_forward.1} parent=11 // pred_fallthru
          _
      $region12: #{vae_forward.1} parent=5 // pred_fallthru
        _
      %p399 = scmp.lt.s32.totalorder %s20, 2
      // Predicated region
      $region65: #{vae_forward.1} parent=5 // pred_check
        %p400 = pneg %p399
      $region66: #{vae_forward.1} parent=5 // pred_check_branch
        %402 = sbr.rel (%p400) target = $region68
      $region67: #{vae_forward.1} parent=5 // pred_region
        // Predicated region
        $region69: #{vae_forward.1} parent=67 // pred_check
          %p403 = pneg %p40
        $region70: #{vae_forward.1} parent=67 // pred_check_branch
          %405 = sbr.rel (%p403) target = $region72
        $region71: #{vae_forward.1} parent=67 // pred_region
          %s406 = sand.u32 %s30, 1
          %s407 = sand.u32 %s30, 1
          %s408 = smul.addr %s407, 160
          %s409 = scalar_lea.vmem [#allocation2], %s408
          %s410 = smul.u32 4, %s20
          %s411 = smul.addr %s410, 8
          %s412 = scalar_lea.vmem %s0, %s411
          // Predicated region
          $region73: #{vae_forward.1} parent=71 // pred_check
            _
          $region74: #{vae_forward.1} parent=71 // pred_check_branch
            %414 = sbr.rel (0) target = $region76
          $region75: #{vae_forward.1} parent=71 // pred_region
            // Predicated region
            $region77: #{vae_forward.1} parent=75 // pred_check
              _
            $region78: #{vae_forward.1} parent=75 // pred_check_branch
              %416 = sbr.rel (0) target = $region80
            $region79: #{vae_forward.1} parent=75 // pred_region
              loop: start=0, step=1, limit=1
              $region81: #{vae_forward.1} parent=79 // loop_pre_header
                _
              $region82: #{vae_forward.1} parent=79 // loop_header
                %s418 = sphi 0, %s422
                %p419 = scmp.ge.s32.totalorder %s418, 1
                %s423 = sphi %s412, %s412
                %s424 = sphi %s409, %s409
              $region83: #{vae_forward.1} parent=79 // loop_header_branch
                %421 = sbr.rel (%p419) target = $region87
              $region84: #{vae_forward.1} parent=79 // loop_body
                %v425 = vld [vmem:[%s423] sm:$0xff]
                %426 = vst [vmem:[%s424] sm:$0xff] %v425
                %v427 = vld [vmem:[%s423 + $0x8] sm:$0xff]
                %428 = vst [vmem:[%s424 + $0x8] sm:$0xff] %v427
                %v429 = vld [vmem:[%s423 + $0x10] sm:$0xff]
                %430 = vst [vmem:[%s424 + $0x10] sm:$0xff] %v429
                %v431 = vld [vmem:[%s423 + $0x18] sm:$0xff]
                %432 = vst [vmem:[%s424 + $0x18] sm:$0xff] %v431
                %v433 = vld [vmem:[%s423 + $0x40] sm:$0xff]
                %434 = vst [vmem:[%s424 + $0x20] sm:$0xff] %v433
                %v435 = vld [vmem:[%s423 + $0x48] sm:$0xff]
                %436 = vst [vmem:[%s424 + $0x28] sm:$0xff] %v435
                %v437 = vld [vmem:[%s423 + $0x50] sm:$0xff]
                %438 = vst [vmem:[%s424 + $0x30] sm:$0xff] %v437
                %v439 = vld [vmem:[%s423 + $0x58] sm:$0xff]
                %440 = vst [vmem:[%s424 + $0x38] sm:$0xff] %v439
                %v441 = vld [vmem:[%s423 + $0x80] sm:$0xff]
                %442 = vst [vmem:[%s424 + $0x40] sm:$0xff] %v441
                %v443 = vld [vmem:[%s423 + $0x88] sm:$0xff]
                %444 = vst [vmem:[%s424 + $0x48] sm:$0xff] %v443
                %v445 = vld [vmem:[%s423 + $0x90] sm:$0xff]
                %446 = vst [vmem:[%s424 + $0x50] sm:$0xff] %v445
                %v447 = vld [vmem:[%s423 + $0x98] sm:$0xff]
                %448 = vst [vmem:[%s424 + $0x58] sm:$0xff] %v447
                %v449 = vld [vmem:[%s423 + $0xc0] sm:$0xff]
                %450 = vst [vmem:[%s424 + $0x60] sm:$0xff] %v449
                %v451 = vld [vmem:[%s423 + $0xc8] sm:$0xff]
                %452 = vst [vmem:[%s424 + $0x68] sm:$0xff] %v451
                %v453 = vld [vmem:[%s423 + $0xd0] sm:$0xff]
                %454 = vst [vmem:[%s424 + $0x70] sm:$0xff] %v453
                %v455 = vld [vmem:[%s423 + $0xd8] sm:$0xff]
                %456 = vst [vmem:[%s424 + $0x78] sm:$0xff] %v455
                %v457 = vld [vmem:[%s423 + $0x100] sm:$0xff]
                %458 = vst [vmem:[%s424 + $0x80] sm:$0xff] %v457
                %v459 = vld [vmem:[%s423 + $0x108] sm:$0xff]
                %460 = vst [vmem:[%s424 + $0x88] sm:$0xff] %v459
                %v461 = vld [vmem:[%s423 + $0x110] sm:$0xff]
                %462 = vst [vmem:[%s424 + $0x90] sm:$0xff] %v461
                %v463 = vld [vmem:[%s423 + $0x118] sm:$0xff]
                %464 = vst [vmem:[%s424 + $0x98] sm:$0xff] %v463
              $region85: #{vae_forward.1} parent=79 // loop_footer
                %s422 = sadd.s32 1, %s418
              $region86: #{vae_forward.1} parent=79 // loop_footer_branch
                %417 = sbr.rel target = $region82
              $region87: #{vae_forward.1} parent=79 // loop_exit
                _
            $region80: #{vae_forward.1} parent=75 // pred_fallthru
              _
            // Predicated region
            $region88: #{vae_forward.1} parent=75 // pred_check
              _
            $region89: #{vae_forward.1} parent=75 // pred_check_branch
              %466 = sbr.rel target = $region91
            $region90: #{vae_forward.1} parent=75 // pred_region
              _
            $region91: #{vae_forward.1} parent=75 // pred_fallthru
              _
          $region76: #{vae_forward.1} parent=71 // pred_fallthru
            _
          %467 = vnop
        $region72: #{vae_forward.1} parent=67 // pred_fallthru
          _
      $region68: #{vae_forward.1} parent=5 // pred_fallthru
        _
      %p468 = scmp.le.s32.totalorder 1, %s20
      %p469 = scmp.lt.s32.totalorder %s20, 3
      %p470 = pnand %p468, %p469
      %p471 = pneg %p470
      // Predicated region
      $region92: #{vae_forward.1} parent=5 // pred_check
        _
      $region93: #{vae_forward.1} parent=5 // pred_check_branch
        %473 = sbr.rel (%p470) target = $region95
      $region94: #{vae_forward.1} parent=5 // pred_region
        %s474 = ssub.s32 %s20, 1
        %s475 = sand.u32 %s33, 1
        %s476 = sand.u32 %s33, 1
        %s477 = smul.addr %s476, 160
        %s478 = scalar_lea.vmem [#allocation2], %s477
        // Predicated region
        $region96: #{vae_forward.1} parent=94 // pred_check
          %p479 = pneg %p46
        $region97: #{vae_forward.1} parent=94 // pred_check_branch
          %481 = sbr.rel (%p479) target = $region99
        $region98: #{vae_forward.1} parent=94 // pred_region
          _
        $region99: #{vae_forward.1} parent=94 // pred_fallthru
          _
        %s482 = sand.u32 %s33, 1
        %s483 = sand.u32 %s33, 1
        %s484 = smul.addr %s483, 160
        %s485 = scalar_lea.vmem [#allocation2], %s484
        %p486 = pneg %p46
        %p487 = pneg %p43
        %p488 = pneg %p67
        %p489 = pneg %p64
        %p490 = pneg %p88
        %p491 = pneg %p85
        %p492 = pneg %p109
        %p493 = pneg %p106
        %p494 = pneg %p130
        %p495 = pneg %p127
        %p496 = pneg %p151
        %p497 = pneg %p148
        %p498 = pneg %p172
        %p499 = pneg %p169
        %p500 = pneg %p193
        %p501 = pneg %p190
        %p502 = pneg %p214
        %p503 = pneg %p211
        %p504 = pneg %p235
        %p505 = pneg %p232
        %p506 = pneg %p256
        %p507 = pneg %p253
        %p508 = pneg %p277
        %p509 = pneg %p274
        %p510 = pneg %p298
        %p511 = pneg %p295
        %p512 = pneg %p319
        %p513 = pneg %p316
        %p514 = pneg %p345
        %p515 = pneg %p342
        %s516 = sand.u32 %s332, 1
        %s517 = sand.u32 %s332, 1
        %s518 = smul.addr %s517, 192
        %s519 = scalar_lea.vmem [#allocation3], %s518
        %s520 = smul.u32 4, %s25
        %s521 = smul.u32 4, %s25
        %v523 = vld [vmem:[%s478] sm:$0xff]
        %v524 = vld [vmem:[%s478 + $0x8] sm:$0xff]
        %v525 = vld [vmem:[%s478 + $0x10] sm:$0xff]
        %v526 = vld [vmem:[%s478 + $0x18] sm:$0xff]
        %v527 = vld [vmem:[%s478 + $0x20] sm:$0xff]
        %v528 = vld [vmem:[%s478 + $0x28] sm:$0xff]
        %v529 = vld [vmem:[%s478 + $0x30] sm:$0xff]
        %v530 = vld [vmem:[%s478 + $0x38] sm:$0xff]
        %v531 = vld [vmem:[%s478 + $0x40] sm:$0xff]
        %v532 = vld [vmem:[%s478 + $0x48] sm:$0xff]
        %v533 = vld [vmem:[%s478 + $0x50] sm:$0xff]
        %v534 = vld [vmem:[%s478 + $0x58] sm:$0xff]
        %v535 = vpack.c.bf16 %v527, %v523
        %v536 = vpack.c.bf16 %v528, %v524
        %v537 = vpack.c.bf16 %v529, %v525
        %v538 = vpack.c.bf16 %v530, %v526
        %v539 = vpack.c.bf16 %v531, %v531
        %v540 = vpack.c.bf16 %v532, %v532
        %v541 = vpack.c.bf16 %v533, %v533
        %v542 = vpack.c.bf16 %v534, %v534
        %v543 = vld [vmem:[%s478 + $0x60] sm:$0xff]
        %v544 = vld [vmem:[%s478 + $0x68] sm:$0xff]
        %v545 = vld [vmem:[%s478 + $0x70] sm:$0xff]
        %v546 = vld [vmem:[%s478 + $0x78] sm:$0xff]
        %v547 = vld [vmem:[%s478 + $0x80] sm:$0x3]
        %v548 = vld [vmem:[%s478 + $0x88] sm:$0x3]
        %v549 = vld [vmem:[%s478 + $0x90] sm:$0x3]
        %v550 = vld [vmem:[%s478 + $0x98] sm:$0x3]
        %v551 = vld [vmem:[%s2] sm:$0xf]
        %v552 = vld [vmem:[%s2 + $0x4] sm:$0xf]
        %v553 = vld [vmem:[%s2 + $0x8] sm:$0xf]
        %v554 = vld [vmem:[%s2 + $0xc] sm:$0xf]
        %v555 = vld [vmem:[%s2 + $0x10] sm:$0xf]
        %v556 = vld [vmem:[%s2 + $0x14] sm:$0xf]
        %v557 = vld [vmem:[%s2 + $0x18] sm:$0xf]
        %v558 = vld [vmem:[%s2 + $0x1c] sm:$0xf]
        %v559 = vld [vmem:[%s3] sm:$0xff]
        %v560 = vld [vmem:[%s3 + $0x8] sm:$0xff]
        %v561 = vld [vmem:[%s3 + $0x10] sm:$0xff]
        %v562 = vld [vmem:[%s3 + $0x18] sm:$0xff]
        %v563 = vld [vmem:[%s3 + $0x20] sm:$0xff]
        %v564 = vld [vmem:[%s3 + $0x28] sm:$0xff]
        %v565 = vld [vmem:[%s3 + $0x30] sm:$0xff]
        %v566 = vld [vmem:[%s3 + $0x38] sm:$0xff]
        %568 = vset.pattern.permute.xlu0 0
        %569 = vperm.xlu0 %568, %v559
        %v570 = vpop.permute.xlu0 %569
        %573 = vset.pattern.permute.xlu0 0
        %574 = vperm.xlu0 %573, %v560
        %v575 = vpop.permute.xlu0 %574
        %578 = vset.pattern.permute.xlu0 0
        %579 = vperm.xlu0 %578, %v561
        %v580 = vpop.permute.xlu0 %579
        %583 = vset.pattern.permute.xlu0 0
        %584 = vperm.xlu0 %583, %v562
        %v585 = vpop.permute.xlu0 %584
        %588 = vset.pattern.permute.xlu0 0
        %589 = vperm.xlu0 %588, %v563
        %v590 = vpop.permute.xlu0 %589
        %593 = vset.pattern.permute.xlu0 0
        %594 = vperm.xlu0 %593, %v564
        %v595 = vpop.permute.xlu0 %594
        %598 = vset.pattern.permute.xlu0 0
        %599 = vperm.xlu0 %598, %v565
        %v600 = vpop.permute.xlu0 %599
        %603 = vset.pattern.permute.xlu0 0
        %604 = vperm.xlu0 %603, %v566
        %v605 = vpop.permute.xlu0 %604
        %v615 = vunpack.c.l.b16 %v551
        %v616 = vunpack.c.l.b16 %v552
        %v617 = vunpack.c.l.b16 %v553
        %v618 = vunpack.c.l.b16 %v554
        %v619 = vunpack.c.l.b16 %v555
        %v620 = vunpack.c.l.b16 %v556
        %v621 = vunpack.c.l.b16 %v557
        %v622 = vunpack.c.l.b16 %v558
        %v623 = vpack.c.b16 %v616, %v615
        %v624 = vpack.c.b16 %v618, %v617
        %v625 = vpack.c.b16 %v620, %v619
        %v626 = vpack.c.b16 %v622, %v621
        %vm627 = vcmask 195584
        %v629 = vsel %vm627, %v623, 0
        %v632 = vsel %vm627, %v624, 0
        %v635 = vsel %vm627, %v625, 0
        %v638 = vsel %vm627, %v626, 0
        %vm640 = vcmask 1043456
        %v642 = vsel %vm640, %v539, 0
        %v645 = vsel %vm640, %v540, 0
        %v648 = vsel %vm640, %v541, 0
        %v651 = vsel %vm640, %v542, 0
        %653 = vmatpush.bf16.msra.mxu0 0
        %654 = vmatpush.bf16.msra.mxu0 0
        %655 = vmatpush.bf16.msra.mxu0 0
        %656 = vmatpush.bf16.msra.mxu0 0
        %657 = vmatpush.bf16.msra.mxu0 0
        %658 = vmatpush.bf16.msra.mxu0 0
        %659 = vmatpush.bf16.msra.mxu0 %v642
        %660 = vmatpush.bf16.msra.mxu0 %v535
        %661 = vmatmul.bf16.gmra.mxu0 %v629
        %v662 = vpop.f32.mrf.mxu0
        %v663 = vadd.f32 %v570, %v662
        %v664 = vpop.f32.mrf.mxu0
        %v665 = vadd.f32 %v575, %v664
        %666 = vmatmul.bf16.gmra.mxu0 %v632
        %v667 = vpop.f32.mrf.mxu0
        %v668 = vadd.f32 %v580, %v667
        %v669 = vpop.f32.mrf.mxu0
        %v670 = vadd.f32 %v585, %v669
        %671 = vmatmul.bf16.gmra.mxu0 %v635
        %v672 = vpop.f32.mrf.mxu0
        %v673 = vadd.f32 %v590, %v672
        %v674 = vpop.f32.mrf.mxu0
        %v675 = vadd.f32 %v595, %v674
        %676 = vmatmul.bf16.gmra.mxu0 %v638
        %v677 = vpop.f32.mrf.mxu0
        %v678 = vadd.f32 %v600, %v677
        %v679 = vpop.f32.mrf.mxu0
        %v680 = vadd.f32 %v605, %v679
        %681 = vdwg.mxu0
        %682 = vmatpush.bf16.msra.mxu0 0
        %683 = vmatpush.bf16.msra.mxu0 0
        %684 = vmatpush.bf16.msra.mxu0 0
        %685 = vmatpush.bf16.msra.mxu0 0
        %686 = vmatpush.bf16.msra.mxu0 0
        %687 = vmatpush.bf16.msra.mxu0 0
        %688 = vmatpush.bf16.msra.mxu0 %v645
        %689 = vmatpush.bf16.msra.mxu0 %v536
        %690 = vmatmul.bf16.gmra.mxu0 %v629
        %v691 = vpop.f32.mrf.mxu0
        %v692 = vadd.f32 %v570, %v691
        %v693 = vpop.f32.mrf.mxu0
        %v694 = vadd.f32 %v575, %v693
        %695 = vmatmul.bf16.gmra.mxu0 %v632
        %v696 = vpop.f32.mrf.mxu0
        %v697 = vadd.f32 %v580, %v696
        %v698 = vpop.f32.mrf.mxu0
        %v699 = vadd.f32 %v585, %v698
        %700 = vmatmul.bf16.gmra.mxu0 %v635
        %v701 = vpop.f32.mrf.mxu0
        %v702 = vadd.f32 %v590, %v701
        %v703 = vpop.f32.mrf.mxu0
        %v704 = vadd.f32 %v595, %v703
        %705 = vmatmul.bf16.gmra.mxu0 %v638
        %v706 = vpop.f32.mrf.mxu0
        %v707 = vadd.f32 %v600, %v706
        %v708 = vpop.f32.mrf.mxu0
        %v709 = vadd.f32 %v605, %v708
        %710 = vdwg.mxu0
        %711 = vmatpush.bf16.msra.mxu0 0
        %712 = vmatpush.bf16.msra.mxu0 0
        %713 = vmatpush.bf16.msra.mxu0 0
        %714 = vmatpush.bf16.msra.mxu0 0
        %715 = vmatpush.bf16.msra.mxu0 0
        %716 = vmatpush.bf16.msra.mxu0 0
        %717 = vmatpush.bf16.msra.mxu0 %v648
        %718 = vmatpush.bf16.msra.mxu0 %v537
        %719 = vmatmul.bf16.gmra.mxu0 %v629
        %v720 = vpop.f32.mrf.mxu0
        %v721 = vadd.f32 %v570, %v720
        %v722 = vpop.f32.mrf.mxu0
        %v723 = vadd.f32 %v575, %v722
        %724 = vmatmul.bf16.gmra.mxu0 %v632
        %v725 = vpop.f32.mrf.mxu0
        %v726 = vadd.f32 %v580, %v725
        %v727 = vpop.f32.mrf.mxu0
        %v728 = vadd.f32 %v585, %v727
        %729 = vmatmul.bf16.gmra.mxu0 %v635
        %v730 = vpop.f32.mrf.mxu0
        %v731 = vadd.f32 %v590, %v730
        %v732 = vpop.f32.mrf.mxu0
        %v733 = vadd.f32 %v595, %v732
        %734 = vmatmul.bf16.gmra.mxu0 %v638
        %v735 = vpop.f32.mrf.mxu0
        %v736 = vadd.f32 %v600, %v735
        %v737 = vpop.f32.mrf.mxu0
        %v738 = vadd.f32 %v605, %v737
        %739 = vdwg.mxu0
        %740 = vmatpush.bf16.msra.mxu0 0
        %741 = vmatpush.bf16.msra.mxu0 0
        %742 = vmatpush.bf16.msra.mxu0 0
        %743 = vmatpush.bf16.msra.mxu0 0
        %744 = vmatpush.bf16.msra.mxu0 0
        %745 = vmatpush.bf16.msra.mxu0 0
        %746 = vmatpush.bf16.msra.mxu0 %v651
        %747 = vmatpush.bf16.msra.mxu0 %v538
        %748 = vmatmul.bf16.gmra.mxu0 %v629
        %v749 = vpop.f32.mrf.mxu0
        %v750 = vadd.f32 %v570, %v749
        %v751 = vpop.f32.mrf.mxu0
        %v752 = vadd.f32 %v575, %v751
        %753 = vmatmul.bf16.gmra.mxu0 %v632
        %v754 = vpop.f32.mrf.mxu0
        %v755 = vadd.f32 %v580, %v754
        %v756 = vpop.f32.mrf.mxu0
        %v757 = vadd.f32 %v585, %v756
        %758 = vmatmul.bf16.gmra.mxu0 %v635
        %v759 = vpop.f32.mrf.mxu0
        %v760 = vadd.f32 %v590, %v759
        %v761 = vpop.f32.mrf.mxu0
        %v762 = vadd.f32 %v595, %v761
        %763 = vmatmul.bf16.gmra.mxu0 %v638
        %v764 = vpop.f32.mrf.mxu0
        %v765 = vadd.f32 %v600, %v764
        %v766 = vpop.f32.mrf.mxu0
        %v767 = vadd.f32 %v605, %v766
        %768 = vdwg.mxu0
        %v769 = vmax.f32 %v663, 0.0
        %v770 = vmax.f32 %v692, 0.0
        %v771 = vmax.f32 %v721, 0.0
        %v772 = vmax.f32 %v750, 0.0
        %v773 = vmax.f32 %v665, 0.0
        %v774 = vmax.f32 %v694, 0.0
        %v775 = vmax.f32 %v723, 0.0
        %v776 = vmax.f32 %v752, 0.0
        %v777 = vmax.f32 %v668, 0.0
        %v778 = vmax.f32 %v697, 0.0
        %v779 = vmax.f32 %v726, 0.0
        %v780 = vmax.f32 %v755, 0.0
        %v781 = vmax.f32 %v670, 0.0
        %v782 = vmax.f32 %v699, 0.0
        %v783 = vmax.f32 %v728, 0.0
        %v784 = vmax.f32 %v757, 0.0
        %v785 = vmax.f32 %v673, 0.0
        %v786 = vmax.f32 %v702, 0.0
        %v787 = vmax.f32 %v731, 0.0
        %v788 = vmax.f32 %v760, 0.0
        %v789 = vmax.f32 %v675, 0.0
        %v790 = vmax.f32 %v704, 0.0
        %v791 = vmax.f32 %v733, 0.0
        %v792 = vmax.f32 %v762, 0.0
        %v793 = vmax.f32 %v678, 0.0
        %v794 = vmax.f32 %v707, 0.0
        %v795 = vmax.f32 %v736, 0.0
        %v796 = vmax.f32 %v765, 0.0
        %v797 = vmax.f32 %v680, 0.0
        %v798 = vmax.f32 %v709, 0.0
        %v799 = vmax.f32 %v738, 0.0
        %v800 = vmax.f32 %v767, 0.0
        %v801 = vpack.c.bf16 %v773, %v769
        %v802 = vpack.c.bf16 %v774, %v770
        %v803 = vpack.c.bf16 %v775, %v771
        %v804 = vpack.c.bf16 %v776, %v772
        %v805 = vpack.c.bf16 %v781, %v777
        %v806 = vpack.c.bf16 %v782, %v778
        %v807 = vpack.c.bf16 %v783, %v779
        %v808 = vpack.c.bf16 %v784, %v780
        %v809 = vpack.c.bf16 %v789, %v785
        %v810 = vpack.c.bf16 %v790, %v786
        %v811 = vpack.c.bf16 %v791, %v787
        %v812 = vpack.c.bf16 %v792, %v788
        %v813 = vpack.c.bf16 %v797, %v793
        %v814 = vpack.c.bf16 %v798, %v794
        %v815 = vpack.c.bf16 %v799, %v795
        %v816 = vpack.c.bf16 %v800, %v796
        %v817 = vld [vmem:[%s4] sm:$0xf]
        %v818 = vld [vmem:[%s4 + $0x4] sm:$0xf]
        %v819 = vld [vmem:[%s4 + $0x8] sm:$0xf]
        %v820 = vld [vmem:[%s4 + $0xc] sm:$0xf]
        %v821 = vld [vmem:[%s5] sm:$0xff]
        %v822 = vld [vmem:[%s5 + $0x8] sm:$0xff]
        %v823 = vld [vmem:[%s5 + $0x10] sm:$0xff]
        %v824 = vld [vmem:[%s5 + $0x18] sm:$0xff]
        %826 = vset.pattern.permute.xlu0 0
        %827 = vperm.xlu0 %826, %v821
        %v828 = vpop.permute.xlu0 %827
        %831 = vset.pattern.permute.xlu0 0
        %832 = vperm.xlu0 %831, %v822
        %v833 = vpop.permute.xlu0 %832
        %836 = vset.pattern.permute.xlu0 0
        %837 = vperm.xlu0 %836, %v823
        %v838 = vpop.permute.xlu0 %837
        %841 = vset.pattern.permute.xlu0 0
        %842 = vperm.xlu0 %841, %v824
        %v843 = vpop.permute.xlu0 %842
        %v849 = vunpack.c.l.b16 %v817
        %v850 = vunpack.c.l.b16 %v818
        %v851 = vunpack.c.l.b16 %v819
        %v852 = vunpack.c.l.b16 %v820
        %v853 = vpack.c.b16 %v850, %v849
        %v854 = vpack.c.b16 %v852, %v851
        %vm855 = vcmask 523264
        %v857 = vsel %vm855, %v853, 0
        %v860 = vsel %vm855, %v854, 0
        %862 = vmatpush.bf16.msra.mxu0 0
        %863 = vmatpush.bf16.msra.mxu0 0
        %864 = vmatpush.bf16.msra.mxu0 0
        %865 = vmatpush.bf16.msra.mxu0 0
        %866 = vmatpush.bf16.msra.mxu0 %v813
        %867 = vmatpush.bf16.msra.mxu0 %v809
        %868 = vmatpush.bf16.msra.mxu0 %v805
        %869 = vmatpush.bf16.msra.mxu0 %v801
        %870 = vmatmul.bf16.gmra.mxu0 %v857
        %v871 = vpop.f32.mrf.mxu0
        %v872 = vadd.f32 %v828, %v871
        %v873 = vpop.f32.mrf.mxu0
        %v874 = vadd.f32 %v833, %v873
        %875 = vmatmul.bf16.gmra.mxu0 %v860
        %v876 = vpop.f32.mrf.mxu0
        %v877 = vadd.f32 %v838, %v876
        %v878 = vpop.f32.mrf.mxu0
        %v879 = vadd.f32 %v843, %v878
        %880 = vdwg.mxu0
        %881 = vmatpush.bf16.msra.mxu0 0
        %882 = vmatpush.bf16.msra.mxu0 0
        %883 = vmatpush.bf16.msra.mxu0 0
        %884 = vmatpush.bf16.msra.mxu0 0
        %885 = vmatpush.bf16.msra.mxu0 %v814
        %886 = vmatpush.bf16.msra.mxu0 %v810
        %887 = vmatpush.bf16.msra.mxu0 %v806
        %888 = vmatpush.bf16.msra.mxu0 %v802
        %889 = vmatmul.bf16.gmra.mxu0 %v857
        %v890 = vpop.f32.mrf.mxu0
        %v891 = vadd.f32 %v828, %v890
        %v892 = vpop.f32.mrf.mxu0
        %v893 = vadd.f32 %v833, %v892
        %894 = vmatmul.bf16.gmra.mxu0 %v860
        %v895 = vpop.f32.mrf.mxu0
        %v896 = vadd.f32 %v838, %v895
        %v897 = vpop.f32.mrf.mxu0
        %v898 = vadd.f32 %v843, %v897
        %899 = vdwg.mxu0
        %900 = vmatpush.bf16.msra.mxu0 0
        %901 = vmatpush.bf16.msra.mxu0 0
        %902 = vmatpush.bf16.msra.mxu0 0
        %903 = vmatpush.bf16.msra.mxu0 0
        %904 = vmatpush.bf16.msra.mxu0 %v815
        %905 = vmatpush.bf16.msra.mxu0 %v811
        %906 = vmatpush.bf16.msra.mxu0 %v807
        %907 = vmatpush.bf16.msra.mxu0 %v803
        %908 = vmatmul.bf16.gmra.mxu0 %v857
        %v909 = vpop.f32.mrf.mxu0
        %v910 = vadd.f32 %v828, %v909
        %v911 = vpop.f32.mrf.mxu0
        %v912 = vadd.f32 %v833, %v911
        %913 = vmatmul.bf16.gmra.mxu0 %v860
        %v914 = vpop.f32.mrf.mxu0
        %v915 = vadd.f32 %v838, %v914
        %v916 = vpop.f32.mrf.mxu0
        %v917 = vadd.f32 %v843, %v916
        %918 = vdwg.mxu0
        %919 = vmatpush.bf16.msra.mxu0 0
        %920 = vmatpush.bf16.msra.mxu0 0
        %921 = vmatpush.bf16.msra.mxu0 0
        %922 = vmatpush.bf16.msra.mxu0 0
        %923 = vmatpush.bf16.msra.mxu0 %v816
        %924 = vmatpush.bf16.msra.mxu0 %v812
        %925 = vmatpush.bf16.msra.mxu0 %v808
        %926 = vmatpush.bf16.msra.mxu0 %v804
        %927 = vmatmul.bf16.gmra.mxu0 %v857
        %v928 = vpop.f32.mrf.mxu0
        %v929 = vadd.f32 %v828, %v928
        %v930 = vpop.f32.mrf.mxu0
        %v931 = vadd.f32 %v833, %v930
        %932 = vmatmul.bf16.gmra.mxu0 %v860
        %v933 = vpop.f32.mrf.mxu0
        %v934 = vadd.f32 %v838, %v933
        %v935 = vpop.f32.mrf.mxu0
        %v936 = vadd.f32 %v843, %v935
        %937 = vdwg.mxu0
        %v938 = vmax.f32 %v872, 0.0
        %v939 = vmax.f32 %v891, 0.0
        %v940 = vmax.f32 %v910, 0.0
        %v941 = vmax.f32 %v929, 0.0
        %v942 = vmax.f32 %v874, 0.0
        %v943 = vmax.f32 %v893, 0.0
        %v944 = vmax.f32 %v912, 0.0
        %v945 = vmax.f32 %v931, 0.0
        %v946 = vmax.f32 %v877, 0.0
        %v947 = vmax.f32 %v896, 0.0
        %v948 = vmax.f32 %v915, 0.0
        %v949 = vmax.f32 %v934, 0.0
        %v950 = vmax.f32 %v879, 0.0
        %v951 = vmax.f32 %v898, 0.0
        %v952 = vmax.f32 %v917, 0.0
        %v953 = vmax.f32 %v936, 0.0
        %v954 = vpack.c.bf16 %v942, %v938
        %v955 = vpack.c.bf16 %v943, %v939
        %v956 = vpack.c.bf16 %v944, %v940
        %v957 = vpack.c.bf16 %v945, %v941
        %v958 = vpack.c.bf16 %v950, %v946
        %v959 = vpack.c.bf16 %v951, %v947
        %v960 = vpack.c.bf16 %v952, %v948
        %v961 = vpack.c.bf16 %v953, %v949
        %v962 = vld [vmem:[%s6] sm:$0xf]
        %v963 = vld [vmem:[%s6 + $0x4] sm:$0xf]
        %v964 = vld [vmem:[%s6 + $0x8] sm:$0x3]
        %v965 = vld [vmem:[%s7] sm:$0xff]
        %v966 = vld [vmem:[%s7 + $0x8] sm:$0xff]
        %v967 = vld [vmem:[%s7 + $0x10] sm:$0xf]
        %969 = vset.pattern.permute.xlu0 0
        %970 = vperm.xlu0 %969, %v965
        %v971 = vpop.permute.xlu0 %970
        %974 = vset.pattern.permute.xlu0 0
        %975 = vperm.xlu0 %974, %v966
        %v976 = vpop.permute.xlu0 %975
        %979 = vset.pattern.permute.xlu0 0
        %980 = vperm.xlu0 %979, %v967
        %v981 = vpop.permute.xlu0 %980
        %v986 = vunpack.c.l.b16 %v962
        %v987 = vunpack.c.l.b16 %v963
        %v988 = vunpack.c.l.b16 %v964
        %v989 = vpack.c.b16 %v987, %v986
        %v990 = vpack.c.b16 %v988, %v988
        %vm991 = vcmask 261120
        %v993 = vsel %vm991, %v989, 0
        %v996 = vsel %vm991, %v990, 0
        %998 = vmatpush.bf16.msra.mxu0 0
        %999 = vmatpush.bf16.msra.mxu0 0
        %1000 = vmatpush.bf16.msra.mxu0 0
        %1001 = vmatpush.bf16.msra.mxu0 0
        %1002 = vmatpush.bf16.msra.mxu0 0
        %1003 = vmatpush.bf16.msra.mxu0 0
        %1004 = vmatpush.bf16.msra.mxu0 %v958
        %1005 = vmatpush.bf16.msra.mxu0 %v954
        %1006 = vmatmul.bf16.gmra.mxu0 %v993
        %v1007 = vpop.f32.mrf.mxu0
        %v1008 = vadd.f32 %v971, %v1007
        %v1009 = vpop.f32.mrf.mxu0
        %v1010 = vadd.f32 %v976, %v1009
        %1011 = vmatmul.bf16.gmra.mxu0 %v996
        %v1012 = vpop.f32.mrf.mxu0
        %v1013 = vadd.f32 %v981, %v1012
        %v1014 = vpop.f32.mrf.mxu0
        %1015 = vdwg.mxu0
        %1016 = vmatpush.bf16.msra.mxu0 0
        %1017 = vmatpush.bf16.msra.mxu0 0
        %1018 = vmatpush.bf16.msra.mxu0 0
        %1019 = vmatpush.bf16.msra.mxu0 0
        %1020 = vmatpush.bf16.msra.mxu0 0
        %1021 = vmatpush.bf16.msra.mxu0 0
        %1022 = vmatpush.bf16.msra.mxu0 %v959
        %1023 = vmatpush.bf16.msra.mxu0 %v955
        %1024 = vmatmul.bf16.gmra.mxu0 %v993
        %v1025 = vpop.f32.mrf.mxu0
        %v1026 = vadd.f32 %v971, %v1025
        %v1027 = vpop.f32.mrf.mxu0
        %v1028 = vadd.f32 %v976, %v1027
        %1029 = vmatmul.bf16.gmra.mxu0 %v996
        %v1030 = vpop.f32.mrf.mxu0
        %v1031 = vadd.f32 %v981, %v1030
        %v1032 = vpop.f32.mrf.mxu0
        %1033 = vdwg.mxu0
        %1034 = vmatpush.bf16.msra.mxu0 0
        %1035 = vmatpush.bf16.msra.mxu0 0
        %1036 = vmatpush.bf16.msra.mxu0 0
        %1037 = vmatpush.bf16.msra.mxu0 0
        %1038 = vmatpush.bf16.msra.mxu0 0
        %1039 = vmatpush.bf16.msra.mxu0 0
        %1040 = vmatpush.bf16.msra.mxu0 %v960
        %1041 = vmatpush.bf16.msra.mxu0 %v956
        %1042 = vmatmul.bf16.gmra.mxu0 %v993
        %v1043 = vpop.f32.mrf.mxu0
        %v1044 = vadd.f32 %v971, %v1043
        %v1045 = vpop.f32.mrf.mxu0
        %v1046 = vadd.f32 %v976, %v1045
        %1047 = vmatmul.bf16.gmra.mxu0 %v996
        %v1048 = vpop.f32.mrf.mxu0
        %v1049 = vadd.f32 %v981, %v1048
        %v1050 = vpop.f32.mrf.mxu0
        %1051 = vdwg.mxu0
        %1052 = vmatpush.bf16.msra.mxu0 0
        %1053 = vmatpush.bf16.msra.mxu0 0
        %1054 = vmatpush.bf16.msra.mxu0 0
        %1055 = vmatpush.bf16.msra.mxu0 0
        %1056 = vmatpush.bf16.msra.mxu0 0
        %1057 = vmatpush.bf16.msra.mxu0 0
        %1058 = vmatpush.bf16.msra.mxu0 %v961
        %1059 = vmatpush.bf16.msra.mxu0 %v957
        %1060 = vmatmul.bf16.gmra.mxu0 %v993
        %v1061 = vpop.f32.mrf.mxu0
        %v1062 = vadd.f32 %v971, %v1061
        %v1063 = vpop.f32.mrf.mxu0
        %v1064 = vadd.f32 %v976, %v1063
        %1065 = vmatmul.bf16.gmra.mxu0 %v996
        %v1066 = vpop.f32.mrf.mxu0
        %v1067 = vadd.f32 %v981, %v1066
        %v1068 = vpop.f32.mrf.mxu0
        %1069 = vdwg.mxu0
        %v1070 = vmul.f32 %v1010, 0.5
        %v1071 = vmul.f32 %v1028, 0.5
        %v1072 = vmul.f32 %v1046, 0.5
        %v1073 = vmul.f32 %v1064, 0.5
        %v1074 = vmul.f32 %v1013, 0.5
        %v1075 = vmul.f32 %v1031, 0.5
        %v1076 = vmul.f32 %v1049, 0.5
        %v1077 = vmul.f32 %v1067, 0.5
        %v1078 = vmul.f32 %v1070, 1.442695
        %v1079 = vpow.pop %v1078
        %v1080 = vmul.f32 %v1071, 1.442695
        %v1081 = vpow.pop %v1080
        %v1082 = vmul.f32 %v1072, 1.442695
        %v1083 = vpow.pop %v1082
        %v1084 = vmul.f32 %v1073, 1.442695
        %v1085 = vpow.pop %v1084
        %v1086 = vmul.f32 %v1074, 1.442695
        %v1087 = vpow.pop %v1086
        %v1088 = vmul.f32 %v1075, 1.442695
        %v1089 = vpow.pop %v1088
        %v1090 = vmul.f32 %v1076, 1.442695
        %v1091 = vpow.pop %v1090
        %v1092 = vmul.f32 %v1077, 1.442695
        %v1093 = vpow.pop %v1092
        %vm1102 = vcmask 1045504
        %v1103 = vrot.slane %v1079, 2
        %v1104 = vrot.slane %v1087, 2
        %v1105 = vsel %vm1102, %v1103, %v1104
        %v1106 = vrot.slane %v1081, 2
        %v1107 = vrot.slane %v1089, 2
        %v1108 = vsel %vm1102, %v1106, %v1107
        %v1109 = vrot.slane %v1083, 2
        %v1110 = vrot.slane %v1091, 2
        %v1111 = vsel %vm1102, %v1109, %v1110
        %v1112 = vrot.slane %v1085, 2
        %v1113 = vrot.slane %v1093, 2
        %v1114 = vsel %vm1102, %v1112, %v1113
        %v1123 = vmul.f32 %v543, %v1105
        %v1124 = vmul.f32 %v544, %v1108
        %v1125 = vmul.f32 %v545, %v1111
        %v1126 = vmul.f32 %v546, %v1114
        %v1127 = vmul.f32 %v547, %v1104
        %v1128 = vmul.f32 %v548, %v1107
        %v1129 = vmul.f32 %v549, %v1110
        %v1130 = vmul.f32 %v550, %v1113
        %v1131 = vadd.f32 %v1008, %v1123
        %v1132 = vadd.f32 %v1026, %v1124
        %v1133 = vadd.f32 %v1044, %v1125
        %v1134 = vadd.f32 %v1062, %v1126
        %v1135 = vadd.f32 %v1010, %v1127
        %v1136 = vadd.f32 %v1028, %v1128
        %v1137 = vadd.f32 %v1046, %v1129
        %v1138 = vadd.f32 %v1064, %v1130
        %v1139 = vpack.c.bf16 %v1135, %v1131
        %v1140 = vpack.c.bf16 %v1136, %v1132
        %v1141 = vpack.c.bf16 %v1137, %v1133
        %v1142 = vpack.c.bf16 %v1138, %v1134
        %v1143 = vld [vmem:[%s8] sm:$0xf]
        %v1144 = vld [vmem:[%s8 + $0x4] sm:$0xf]
        %v1145 = vld [vmem:[%s8 + $0x8] sm:$0xf]
        %v1146 = vld [vmem:[%s8 + $0xc] sm:$0xf]
        %v1147 = vld [vmem:[%s9] sm:$0xff]
        %v1148 = vld [vmem:[%s9 + $0x8] sm:$0xff]
        %v1149 = vld [vmem:[%s9 + $0x10] sm:$0xff]
        %v1150 = vld [vmem:[%s9 + $0x18] sm:$0xff]
        %1152 = vset.pattern.permute.xlu0 0
        %1153 = vperm.xlu0 %1152, %v1147
        %v1154 = vpop.permute.xlu0 %1153
        %1157 = vset.pattern.permute.xlu0 0
        %1158 = vperm.xlu0 %1157, %v1148
        %v1159 = vpop.permute.xlu0 %1158
        %1162 = vset.pattern.permute.xlu0 0
        %1163 = vperm.xlu0 %1162, %v1149
        %v1164 = vpop.permute.xlu0 %1163
        %1167 = vset.pattern.permute.xlu0 0
        %1168 = vperm.xlu0 %1167, %v1150
        %v1169 = vpop.permute.xlu0 %1168
        %v1175 = vunpack.c.l.b16 %v1143
        %v1176 = vunpack.c.l.b16 %v1144
        %v1177 = vunpack.c.l.b16 %v1145
        %v1178 = vunpack.c.l.b16 %v1146
        %v1179 = vpack.c.b16 %v1176, %v1175
        %v1180 = vpack.c.b16 %v1178, %v1177
        %vm1181 = vcmask 80896
        %v1183 = vsel %vm1181, %v1179, 0
        %v1186 = vsel %vm1181, %v1180, 0
        %vm1188 = vcmask 1044480
        %v1190 = vsel %vm1188, %v1139, 0
        %v1193 = vsel %vm1188, %v1140, 0
        %v1196 = vsel %vm1188, %v1141, 0
        %v1199 = vsel %vm1188, %v1142, 0
        %1201 = vmatpush.bf16.msra.mxu0 0
        %1202 = vmatpush.bf16.msra.mxu0 0
        %1203 = vmatpush.bf16.msra.mxu0 0
        %1204 = vmatpush.bf16.msra.mxu0 0
        %1205 = vmatpush.bf16.msra.mxu0 0
        %1206 = vmatpush.bf16.msra.mxu0 0
        %1207 = vmatpush.bf16.msra.mxu0 0
        %1208 = vmatpush.bf16.msra.mxu0 %v1190
        %1209 = vmatmul.bf16.gmra.mxu0 %v1183
        %v1210 = vpop.f32.mrf.mxu0
        %v1211 = vadd.f32 %v1154, %v1210
        %v1212 = vpop.f32.mrf.mxu0
        %v1213 = vadd.f32 %v1159, %v1212
        %1214 = vmatmul.bf16.gmra.mxu0 %v1186
        %v1215 = vpop.f32.mrf.mxu0
        %v1216 = vadd.f32 %v1164, %v1215
        %v1217 = vpop.f32.mrf.mxu0
        %v1218 = vadd.f32 %v1169, %v1217
        %1219 = vdwg.mxu0
        %1220 = vmatpush.bf16.msra.mxu0 0
        %1221 = vmatpush.bf16.msra.mxu0 0
        %1222 = vmatpush.bf16.msra.mxu0 0
        %1223 = vmatpush.bf16.msra.mxu0 0
        %1224 = vmatpush.bf16.msra.mxu0 0
        %1225 = vmatpush.bf16.msra.mxu0 0
        %1226 = vmatpush.bf16.msra.mxu0 0
        %1227 = vmatpush.bf16.msra.mxu0 %v1193
        %1228 = vmatmul.bf16.gmra.mxu0 %v1183
        %v1229 = vpop.f32.mrf.mxu0
        %v1230 = vadd.f32 %v1154, %v1229
        %v1231 = vpop.f32.mrf.mxu0
        %v1232 = vadd.f32 %v1159, %v1231
        %1233 = vmatmul.bf16.gmra.mxu0 %v1186
        %v1234 = vpop.f32.mrf.mxu0
        %v1235 = vadd.f32 %v1164, %v1234
        %v1236 = vpop.f32.mrf.mxu0
        %v1237 = vadd.f32 %v1169, %v1236
        %1238 = vdwg.mxu0
        %1239 = vmatpush.bf16.msra.mxu0 0
        %1240 = vmatpush.bf16.msra.mxu0 0
        %1241 = vmatpush.bf16.msra.mxu0 0
        %1242 = vmatpush.bf16.msra.mxu0 0
        %1243 = vmatpush.bf16.msra.mxu0 0
        %1244 = vmatpush.bf16.msra.mxu0 0
        %1245 = vmatpush.bf16.msra.mxu0 0
        %1246 = vmatpush.bf16.msra.mxu0 %v1196
        %1247 = vmatmul.bf16.gmra.mxu0 %v1183
        %v1248 = vpop.f32.mrf.mxu0
        %v1249 = vadd.f32 %v1154, %v1248
        %v1250 = vpop.f32.mrf.mxu0
        %v1251 = vadd.f32 %v1159, %v1250
        %1252 = vmatmul.bf16.gmra.mxu0 %v1186
        %v1253 = vpop.f32.mrf.mxu0
        %v1254 = vadd.f32 %v1164, %v1253
        %v1255 = vpop.f32.mrf.mxu0
        %v1256 = vadd.f32 %v1169, %v1255
        %1257 = vdwg.mxu0
        %1258 = vmatpush.bf16.msra.mxu0 0
        %1259 = vmatpush.bf16.msra.mxu0 0
        %1260 = vmatpush.bf16.msra.mxu0 0
        %1261 = vmatpush.bf16.msra.mxu0 0
        %1262 = vmatpush.bf16.msra.mxu0 0
        %1263 = vmatpush.bf16.msra.mxu0 0
        %1264 = vmatpush.bf16.msra.mxu0 0
        %1265 = vmatpush.bf16.msra.mxu0 %v1199
        %1266 = vmatmul.bf16.gmra.mxu0 %v1183
        %v1267 = vpop.f32.mrf.mxu0
        %v1268 = vadd.f32 %v1154, %v1267
        %v1269 = vpop.f32.mrf.mxu0
        %v1270 = vadd.f32 %v1159, %v1269
        %1271 = vmatmul.bf16.gmra.mxu0 %v1186
        %v1272 = vpop.f32.mrf.mxu0
        %v1273 = vadd.f32 %v1164, %v1272
        %v1274 = vpop.f32.mrf.mxu0
        %v1275 = vadd.f32 %v1169, %v1274
        %1276 = vdwg.mxu0
        %v1277 = vmax.f32 %v1211, 0.0
        %v1278 = vmax.f32 %v1230, 0.0
        %v1279 = vmax.f32 %v1249, 0.0
        %v1280 = vmax.f32 %v1268, 0.0
        %v1281 = vmax.f32 %v1213, 0.0
        %v1282 = vmax.f32 %v1232, 0.0
        %v1283 = vmax.f32 %v1251, 0.0
        %v1284 = vmax.f32 %v1270, 0.0
        %v1285 = vmax.f32 %v1216, 0.0
        %v1286 = vmax.f32 %v1235, 0.0
        %v1287 = vmax.f32 %v1254, 0.0
        %v1288 = vmax.f32 %v1273, 0.0
        %v1289 = vmax.f32 %v1218, 0.0
        %v1290 = vmax.f32 %v1237, 0.0
        %v1291 = vmax.f32 %v1256, 0.0
        %v1292 = vmax.f32 %v1275, 0.0
        %v1293 = vpack.c.bf16 %v1281, %v1277
        %v1294 = vpack.c.bf16 %v1282, %v1278
        %v1295 = vpack.c.bf16 %v1283, %v1279
        %v1296 = vpack.c.bf16 %v1284, %v1280
        %v1297 = vpack.c.bf16 %v1289, %v1285
        %v1298 = vpack.c.bf16 %v1290, %v1286
        %v1299 = vpack.c.bf16 %v1291, %v1287
        %v1300 = vpack.c.bf16 %v1292, %v1288
        %v1301 = vld [vmem:[%s10] sm:$0xf]
        %v1302 = vld [vmem:[%s10 + $0x4] sm:$0xf]
        %v1303 = vld [vmem:[%s10 + $0x8] sm:$0xf]
        %v1304 = vld [vmem:[%s10 + $0xc] sm:$0xf]
        %v1305 = vld [vmem:[%s10 + $0x10] sm:$0xf]
        %v1306 = vld [vmem:[%s10 + $0x14] sm:$0xf]
        %v1307 = vld [vmem:[%s10 + $0x18] sm:$0xf]
        %v1308 = vld [vmem:[%s10 + $0x1c] sm:$0xf]
        %v1309 = vld [vmem:[%s11] sm:$0xff]
        %v1310 = vld [vmem:[%s11 + $0x8] sm:$0xff]
        %v1311 = vld [vmem:[%s11 + $0x10] sm:$0xff]
        %v1312 = vld [vmem:[%s11 + $0x18] sm:$0xff]
        %v1313 = vld [vmem:[%s11 + $0x20] sm:$0xff]
        %v1314 = vld [vmem:[%s11 + $0x28] sm:$0xff]
        %v1315 = vld [vmem:[%s11 + $0x30] sm:$0xff]
        %v1316 = vld [vmem:[%s11 + $0x38] sm:$0xff]
        %1318 = vset.pattern.permute.xlu0 0
        %1319 = vperm.xlu0 %1318, %v1309
        %v1320 = vpop.permute.xlu0 %1319
        %1323 = vset.pattern.permute.xlu0 0
        %1324 = vperm.xlu0 %1323, %v1310
        %v1325 = vpop.permute.xlu0 %1324
        %1328 = vset.pattern.permute.xlu0 0
        %1329 = vperm.xlu0 %1328, %v1311
        %v1330 = vpop.permute.xlu0 %1329
        %1333 = vset.pattern.permute.xlu0 0
        %1334 = vperm.xlu0 %1333, %v1312
        %v1335 = vpop.permute.xlu0 %1334
        %1338 = vset.pattern.permute.xlu0 0
        %1339 = vperm.xlu0 %1338, %v1313
        %v1340 = vpop.permute.xlu0 %1339
        %1343 = vset.pattern.permute.xlu0 0
        %1344 = vperm.xlu0 %1343, %v1314
        %v1345 = vpop.permute.xlu0 %1344
        %1348 = vset.pattern.permute.xlu0 0
        %1349 = vperm.xlu0 %1348, %v1315
        %v1350 = vpop.permute.xlu0 %1349
        %1353 = vset.pattern.permute.xlu0 0
        %1354 = vperm.xlu0 %1353, %v1316
        %v1355 = vpop.permute.xlu0 %1354
        %v1365 = vunpack.c.l.b16 %v1301
        %v1366 = vunpack.c.l.b16 %v1302
        %v1367 = vunpack.c.l.b16 %v1303
        %v1368 = vunpack.c.l.b16 %v1304
        %v1369 = vunpack.c.l.b16 %v1305
        %v1370 = vunpack.c.l.b16 %v1306
        %v1371 = vunpack.c.l.b16 %v1307
        %v1372 = vunpack.c.l.b16 %v1308
        %v1373 = vpack.c.b16 %v1366, %v1365
        %v1374 = vpack.c.b16 %v1368, %v1367
        %v1375 = vpack.c.b16 %v1370, %v1369
        %v1376 = vpack.c.b16 %v1372, %v1371
        %v1378 = vsel %vm991, %v1373, 0
        %v1381 = vsel %vm991, %v1374, 0
        %v1384 = vsel %vm991, %v1375, 0
        %v1387 = vsel %vm991, %v1376, 0
        %1389 = vmatpush.bf16.msra.mxu0 0
        %1390 = vmatpush.bf16.msra.mxu0 0
        %1391 = vmatpush.bf16.msra.mxu0 0
        %1392 = vmatpush.bf16.msra.mxu0 0
        %1393 = vmatpush.bf16.msra.mxu0 0
        %1394 = vmatpush.bf16.msra.mxu0 0
        %1395 = vmatpush.bf16.msra.mxu0 %v1297
        %1396 = vmatpush.bf16.msra.mxu0 %v1293
        %1397 = vmatmul.bf16.gmra.mxu0 %v1378
        %v1398 = vpop.f32.mrf.mxu0
        %v1399 = vadd.f32 %v1320, %v1398
        %v1400 = vpop.f32.mrf.mxu0
        %v1401 = vadd.f32 %v1325, %v1400
        %1402 = vmatmul.bf16.gmra.mxu0 %v1381
        %v1403 = vpop.f32.mrf.mxu0
        %v1404 = vadd.f32 %v1330, %v1403
        %v1405 = vpop.f32.mrf.mxu0
        %v1406 = vadd.f32 %v1335, %v1405
        %1407 = vmatmul.bf16.gmra.mxu0 %v1384
        %v1408 = vpop.f32.mrf.mxu0
        %v1409 = vadd.f32 %v1340, %v1408
        %v1410 = vpop.f32.mrf.mxu0
        %v1411 = vadd.f32 %v1345, %v1410
        %1412 = vmatmul.bf16.gmra.mxu0 %v1387
        %v1413 = vpop.f32.mrf.mxu0
        %v1414 = vadd.f32 %v1350, %v1413
        %v1415 = vpop.f32.mrf.mxu0
        %v1416 = vadd.f32 %v1355, %v1415
        %1417 = vdwg.mxu0
        %1418 = vmatpush.bf16.msra.mxu0 0
        %1419 = vmatpush.bf16.msra.mxu0 0
        %1420 = vmatpush.bf16.msra.mxu0 0
        %1421 = vmatpush.bf16.msra.mxu0 0
        %1422 = vmatpush.bf16.msra.mxu0 0
        %1423 = vmatpush.bf16.msra.mxu0 0
        %1424 = vmatpush.bf16.msra.mxu0 %v1298
        %1425 = vmatpush.bf16.msra.mxu0 %v1294
        %1426 = vmatmul.bf16.gmra.mxu0 %v1378
        %v1427 = vpop.f32.mrf.mxu0
        %v1428 = vadd.f32 %v1320, %v1427
        %v1429 = vpop.f32.mrf.mxu0
        %v1430 = vadd.f32 %v1325, %v1429
        %1431 = vmatmul.bf16.gmra.mxu0 %v1381
        %v1432 = vpop.f32.mrf.mxu0
        %v1433 = vadd.f32 %v1330, %v1432
        %v1434 = vpop.f32.mrf.mxu0
        %v1435 = vadd.f32 %v1335, %v1434
        %1436 = vmatmul.bf16.gmra.mxu0 %v1384
        %v1437 = vpop.f32.mrf.mxu0
        %v1438 = vadd.f32 %v1340, %v1437
        %v1439 = vpop.f32.mrf.mxu0
        %v1440 = vadd.f32 %v1345, %v1439
        %1441 = vmatmul.bf16.gmra.mxu0 %v1387
        %v1442 = vpop.f32.mrf.mxu0
        %v1443 = vadd.f32 %v1350, %v1442
        %v1444 = vpop.f32.mrf.mxu0
        %v1445 = vadd.f32 %v1355, %v1444
        %1446 = vdwg.mxu0
        %1447 = vmatpush.bf16.msra.mxu0 0
        %1448 = vmatpush.bf16.msra.mxu0 0
        %1449 = vmatpush.bf16.msra.mxu0 0
        %1450 = vmatpush.bf16.msra.mxu0 0
        %1451 = vmatpush.bf16.msra.mxu0 0
        %1452 = vmatpush.bf16.msra.mxu0 0
        %1453 = vmatpush.bf16.msra.mxu0 %v1299
        %1454 = vmatpush.bf16.msra.mxu0 %v1295
        %1455 = vmatmul.bf16.gmra.mxu0 %v1378
        %v1456 = vpop.f32.mrf.mxu0
        %v1457 = vadd.f32 %v1320, %v1456
        %v1458 = vpop.f32.mrf.mxu0
        %v1459 = vadd.f32 %v1325, %v1458
        %1460 = vmatmul.bf16.gmra.mxu0 %v1381
        %v1461 = vpop.f32.mrf.mxu0
        %v1462 = vadd.f32 %v1330, %v1461
        %v1463 = vpop.f32.mrf.mxu0
        %v1464 = vadd.f32 %v1335, %v1463
        %1465 = vmatmul.bf16.gmra.mxu0 %v1384
        %v1466 = vpop.f32.mrf.mxu0
        %v1467 = vadd.f32 %v1340, %v1466
        %v1468 = vpop.f32.mrf.mxu0
        %v1469 = vadd.f32 %v1345, %v1468
        %1470 = vmatmul.bf16.gmra.mxu0 %v1387
        %v1471 = vpop.f32.mrf.mxu0
        %v1472 = vadd.f32 %v1350, %v1471
        %v1473 = vpop.f32.mrf.mxu0
        %v1474 = vadd.f32 %v1355, %v1473
        %1475 = vdwg.mxu0
        %1476 = vmatpush.bf16.msra.mxu0 0
        %1477 = vmatpush.bf16.msra.mxu0 0
        %1478 = vmatpush.bf16.msra.mxu0 0
        %1479 = vmatpush.bf16.msra.mxu0 0
        %1480 = vmatpush.bf16.msra.mxu0 0
        %1481 = vmatpush.bf16.msra.mxu0 0
        %1482 = vmatpush.bf16.msra.mxu0 %v1300
        %1483 = vmatpush.bf16.msra.mxu0 %v1296
        %1484 = vmatmul.bf16.gmra.mxu0 %v1378
        %v1485 = vpop.f32.mrf.mxu0
        %v1486 = vadd.f32 %v1320, %v1485
        %v1487 = vpop.f32.mrf.mxu0
        %v1488 = vadd.f32 %v1325, %v1487
        %1489 = vmatmul.bf16.gmra.mxu0 %v1381
        %v1490 = vpop.f32.mrf.mxu0
        %v1491 = vadd.f32 %v1330, %v1490
        %v1492 = vpop.f32.mrf.mxu0
        %v1493 = vadd.f32 %v1335, %v1492
        %1494 = vmatmul.bf16.gmra.mxu0 %v1384
        %v1495 = vpop.f32.mrf.mxu0
        %v1496 = vadd.f32 %v1340, %v1495
        %v1497 = vpop.f32.mrf.mxu0
        %v1498 = vadd.f32 %v1345, %v1497
        %1499 = vmatmul.bf16.gmra.mxu0 %v1387
        %v1500 = vpop.f32.mrf.mxu0
        %v1501 = vadd.f32 %v1350, %v1500
        %v1502 = vpop.f32.mrf.mxu0
        %v1503 = vadd.f32 %v1355, %v1502
        %1504 = vdwg.mxu0
        %v1505 = vmax.f32 %v1399, 0.0
        %v1506 = vmax.f32 %v1428, 0.0
        %v1507 = vmax.f32 %v1457, 0.0
        %v1508 = vmax.f32 %v1486, 0.0
        %v1509 = vmax.f32 %v1401, 0.0
        %v1510 = vmax.f32 %v1430, 0.0
        %v1511 = vmax.f32 %v1459, 0.0
        %v1512 = vmax.f32 %v1488, 0.0
        %v1513 = vmax.f32 %v1404, 0.0
        %v1514 = vmax.f32 %v1433, 0.0
        %v1515 = vmax.f32 %v1462, 0.0
        %v1516 = vmax.f32 %v1491, 0.0
        %v1517 = vmax.f32 %v1406, 0.0
        %v1518 = vmax.f32 %v1435, 0.0
        %v1519 = vmax.f32 %v1464, 0.0
        %v1520 = vmax.f32 %v1493, 0.0
        %v1521 = vmax.f32 %v1409, 0.0
        %v1522 = vmax.f32 %v1438, 0.0
        %v1523 = vmax.f32 %v1467, 0.0
        %v1524 = vmax.f32 %v1496, 0.0
        %v1525 = vmax.f32 %v1411, 0.0
        %v1526 = vmax.f32 %v1440, 0.0
        %v1527 = vmax.f32 %v1469, 0.0
        %v1528 = vmax.f32 %v1498, 0.0
        %v1529 = vmax.f32 %v1414, 0.0
        %v1530 = vmax.f32 %v1443, 0.0
        %v1531 = vmax.f32 %v1472, 0.0
        %v1532 = vmax.f32 %v1501, 0.0
        %v1533 = vmax.f32 %v1416, 0.0
        %v1534 = vmax.f32 %v1445, 0.0
        %v1535 = vmax.f32 %v1474, 0.0
        %v1536 = vmax.f32 %v1503, 0.0
        %v1537 = vpack.c.bf16 %v1509, %v1505
        %v1538 = vpack.c.bf16 %v1510, %v1506
        %v1539 = vpack.c.bf16 %v1511, %v1507
        %v1540 = vpack.c.bf16 %v1512, %v1508
        %v1541 = vpack.c.bf16 %v1517, %v1513
        %v1542 = vpack.c.bf16 %v1518, %v1514
        %v1543 = vpack.c.bf16 %v1519, %v1515
        %v1544 = vpack.c.bf16 %v1520, %v1516
        %v1545 = vpack.c.bf16 %v1525, %v1521
        %v1546 = vpack.c.bf16 %v1526, %v1522
        %v1547 = vpack.c.bf16 %v1527, %v1523
        %v1548 = vpack.c.bf16 %v1528, %v1524
        %v1549 = vpack.c.bf16 %v1533, %v1529
        %v1550 = vpack.c.bf16 %v1534, %v1530
        %v1551 = vpack.c.bf16 %v1535, %v1531
        %v1552 = vpack.c.bf16 %v1536, %v1532
        %v1553 = vld [vmem:[%s12] sm:$0xf]
        %v1554 = vld [vmem:[%s12 + $0x4] sm:$0xf]
        %v1555 = vld [vmem:[%s12 + $0x8] sm:$0xf]
        %v1556 = vld [vmem:[%s13] sm:$0xff]
        %v1557 = vld [vmem:[%s13 + $0x8] sm:$0xff]
        %v1558 = vld [vmem:[%s13 + $0x10] sm:$0xff]
        %1560 = vset.pattern.permute.xlu0 0
        %1561 = vperm.xlu0 %1560, %v1556
        %v1562 = vpop.permute.xlu0 %1561
        %1565 = vset.pattern.permute.xlu0 0
        %1566 = vperm.xlu0 %1565, %v1557
        %v1567 = vpop.permute.xlu0 %1566
        %1570 = vset.pattern.permute.xlu0 0
        %1571 = vperm.xlu0 %1570, %v1558
        %v1572 = vpop.permute.xlu0 %1571
        %v1577 = vunpack.c.l.b16 %v1553
        %v1578 = vunpack.c.l.b16 %v1554
        %v1579 = vunpack.c.l.b16 %v1555
        %v1580 = vpack.c.b16 %v1578, %v1577
        %v1581 = vpack.c.b16 %v1579, %v1579
        %v1583 = vsel %vm855, %v1580, 0
        %v1586 = vsel %vm855, %v1581, 0
        %1588 = vmatpush.bf16.msra.mxu0 0
        %1589 = vmatpush.bf16.msra.mxu0 0
        %1590 = vmatpush.bf16.msra.mxu0 0
        %1591 = vmatpush.bf16.msra.mxu0 0
        %1592 = vmatpush.bf16.msra.mxu0 %v1549
        %1593 = vmatpush.bf16.msra.mxu0 %v1545
        %1594 = vmatpush.bf16.msra.mxu0 %v1541
        %1595 = vmatpush.bf16.msra.mxu0 %v1537
        %1596 = vmatmul.bf16.gmra.mxu0 %v1583
        %v1597 = vpop.f32.mrf.mxu0
        %v1598 = vadd.f32 %v1562, %v1597
        %v1599 = vpop.f32.mrf.mxu0
        %v1600 = vadd.f32 %v1567, %v1599
        %1601 = vmatmul.bf16.gmra.mxu0 %v1586
        %v1602 = vpop.f32.mrf.mxu0
        %v1603 = vadd.f32 %v1572, %v1602
        %v1604 = vpop.f32.mrf.mxu0
        %1605 = vdwg.mxu0
        %1606 = vmatpush.bf16.msra.mxu0 0
        %1607 = vmatpush.bf16.msra.mxu0 0
        %1608 = vmatpush.bf16.msra.mxu0 0
        %1609 = vmatpush.bf16.msra.mxu0 0
        %1610 = vmatpush.bf16.msra.mxu0 %v1550
        %1611 = vmatpush.bf16.msra.mxu0 %v1546
        %1612 = vmatpush.bf16.msra.mxu0 %v1542
        %1613 = vmatpush.bf16.msra.mxu0 %v1538
        %1614 = vmatmul.bf16.gmra.mxu0 %v1583
        %v1615 = vpop.f32.mrf.mxu0
        %v1616 = vadd.f32 %v1562, %v1615
        %v1617 = vpop.f32.mrf.mxu0
        %v1618 = vadd.f32 %v1567, %v1617
        %1619 = vmatmul.bf16.gmra.mxu0 %v1586
        %v1620 = vpop.f32.mrf.mxu0
        %v1621 = vadd.f32 %v1572, %v1620
        %v1622 = vpop.f32.mrf.mxu0
        %1623 = vdwg.mxu0
        %1624 = vmatpush.bf16.msra.mxu0 0
        %1625 = vmatpush.bf16.msra.mxu0 0
        %1626 = vmatpush.bf16.msra.mxu0 0
        %1627 = vmatpush.bf16.msra.mxu0 0
        %1628 = vmatpush.bf16.msra.mxu0 %v1551
        %1629 = vmatpush.bf16.msra.mxu0 %v1547
        %1630 = vmatpush.bf16.msra.mxu0 %v1543
        %1631 = vmatpush.bf16.msra.mxu0 %v1539
        %1632 = vmatmul.bf16.gmra.mxu0 %v1583
        %v1633 = vpop.f32.mrf.mxu0
        %v1634 = vadd.f32 %v1562, %v1633
        %v1635 = vpop.f32.mrf.mxu0
        %v1636 = vadd.f32 %v1567, %v1635
        %1637 = vmatmul.bf16.gmra.mxu0 %v1586
        %v1638 = vpop.f32.mrf.mxu0
        %v1639 = vadd.f32 %v1572, %v1638
        %v1640 = vpop.f32.mrf.mxu0
        %1641 = vdwg.mxu0
        %1642 = vmatpush.bf16.msra.mxu0 0
        %1643 = vmatpush.bf16.msra.mxu0 0
        %1644 = vmatpush.bf16.msra.mxu0 0
        %1645 = vmatpush.bf16.msra.mxu0 0
        %1646 = vmatpush.bf16.msra.mxu0 %v1552
        %1647 = vmatpush.bf16.msra.mxu0 %v1548
        %1648 = vmatpush.bf16.msra.mxu0 %v1544
        %1649 = vmatpush.bf16.msra.mxu0 %v1540
        %1650 = vmatmul.bf16.gmra.mxu0 %v1583
        %v1651 = vpop.f32.mrf.mxu0
        %v1652 = vadd.f32 %v1562, %v1651
        %v1653 = vpop.f32.mrf.mxu0
        %v1654 = vadd.f32 %v1567, %v1653
        %1655 = vmatmul.bf16.gmra.mxu0 %v1586
        %v1656 = vpop.f32.mrf.mxu0
        %v1657 = vadd.f32 %v1572, %v1656
        %v1658 = vpop.f32.mrf.mxu0
        %1659 = vdwg.mxu0
        %v1660 = vld [vmem:[%s1] sm:$0xff]
        %v1661 = vld [vmem:[%s1 + $0x8] sm:$0xff]
        %v1662 = vld [vmem:[%s1 + $0x10] sm:$0xff]
        %v1663 = vxor.u32 %v1598, 2147483648
        %v1664 = vxor.u32 %v1616, 2147483648
        %v1665 = vxor.u32 %v1634, 2147483648
        %v1666 = vxor.u32 %v1652, 2147483648
        %v1667 = vxor.u32 %v1600, 2147483648
        %v1668 = vxor.u32 %v1618, 2147483648
        %v1669 = vxor.u32 %v1636, 2147483648
        %v1670 = vxor.u32 %v1654, 2147483648
        %v1671 = vxor.u32 %v1603, 2147483648
        %v1672 = vxor.u32 %v1621, 2147483648
        %v1673 = vxor.u32 %v1639, 2147483648
        %v1674 = vxor.u32 %v1657, 2147483648
        %v1675 = vmul.f32 %v1663, 1.442695
        %v1676 = vpow.pop %v1675
        %v1677 = vmul.f32 %v1664, 1.442695
        %v1678 = vpow.pop %v1677
        %v1679 = vmul.f32 %v1665, 1.442695
        %v1680 = vpow.pop %v1679
        %v1681 = vmul.f32 %v1666, 1.442695
        %v1682 = vpow.pop %v1681
        %v1683 = vmul.f32 %v1667, 1.442695
        %v1684 = vpow.pop %v1683
        %v1685 = vmul.f32 %v1668, 1.442695
        %v1686 = vpow.pop %v1685
        %v1687 = vmul.f32 %v1669, 1.442695
        %v1688 = vpow.pop %v1687
        %v1689 = vmul.f32 %v1670, 1.442695
        %v1690 = vpow.pop %v1689
        %v1691 = vmul.f32 %v1671, 1.442695
        %v1692 = vpow.pop %v1691
        %v1693 = vmul.f32 %v1672, 1.442695
        %v1694 = vpow.pop %v1693
        %v1695 = vmul.f32 %v1673, 1.442695
        %v1696 = vpow.pop %v1695
        %v1697 = vmul.f32 %v1674, 1.442695
        %v1698 = vpow.pop %v1697
        %v1699 = vadd.f32 %v1676, 1.0
        %v1700 = vadd.f32 %v1678, 1.0
        %v1701 = vadd.f32 %v1680, 1.0
        %v1702 = vadd.f32 %v1682, 1.0
        %v1703 = vadd.f32 %v1684, 1.0
        %v1704 = vadd.f32 %v1686, 1.0
        %v1705 = vadd.f32 %v1688, 1.0
        %v1706 = vadd.f32 %v1690, 1.0
        %v1707 = vadd.f32 %v1692, 1.0
        %v1708 = vadd.f32 %v1694, 1.0
        %v1709 = vadd.f32 %v1696, 1.0
        %v1710 = vadd.f32 %v1698, 1.0
        %v1711 = vrcp.pop %v1699
        %v1712 = vmul.f32 %v1699, %v1711
        %v1713 = vsub.f32 1.0, %v1712
        %v1714 = vmul.f32 %v1711, %v1713
        %v1715 = vadd.f32 %v1711, %v1714
        %vm1716 = vweird.f32 %v1699
        %vm1717 = vweird.f32 %v1711
        %vm1718 = vmor %vm1716, %vm1717
        %v1719 = vsel %vm1718, %v1711, %v1715
        %v1720 = vand.u32 2147483647, %v1699
        %vm1721 = vcmp.eq.f32.partialorder %v1720, 8.507059e+37
        %v1722 = vand.u32 %v1699, 2147483648
        %v1723 = vor.u32 1.1754944e-38, %v1722
        %v1724 = vsel %vm1721, %v1723, %v1719
        %v1725 = vmul.f32 1.0, %v1724
        %v1726 = vrcp.pop %v1700
        %v1727 = vmul.f32 %v1700, %v1726
        %v1728 = vsub.f32 1.0, %v1727
        %v1729 = vmul.f32 %v1726, %v1728
        %v1730 = vadd.f32 %v1726, %v1729
        %vm1731 = vweird.f32 %v1700
        %vm1732 = vweird.f32 %v1726
        %vm1733 = vmor %vm1731, %vm1732
        %v1734 = vsel %vm1733, %v1726, %v1730
        %v1735 = vand.u32 2147483647, %v1700
        %vm1736 = vcmp.eq.f32.partialorder %v1735, 8.507059e+37
        %v1737 = vand.u32 %v1700, 2147483648
        %v1738 = vor.u32 1.1754944e-38, %v1737
        %v1739 = vsel %vm1736, %v1738, %v1734
        %v1740 = vmul.f32 1.0, %v1739
        %v1741 = vrcp.pop %v1701
        %v1742 = vmul.f32 %v1701, %v1741
        %v1743 = vsub.f32 1.0, %v1742
        %v1744 = vmul.f32 %v1741, %v1743
        %v1745 = vadd.f32 %v1741, %v1744
        %vm1746 = vweird.f32 %v1701
        %vm1747 = vweird.f32 %v1741
        %vm1748 = vmor %vm1746, %vm1747
        %v1749 = vsel %vm1748, %v1741, %v1745
        %v1750 = vand.u32 2147483647, %v1701
        %vm1751 = vcmp.eq.f32.partialorder %v1750, 8.507059e+37
        %v1752 = vand.u32 %v1701, 2147483648
        %v1753 = vor.u32 1.1754944e-38, %v1752
        %v1754 = vsel %vm1751, %v1753, %v1749
        %v1755 = vmul.f32 1.0, %v1754
        %v1756 = vrcp.pop %v1702
        %v1757 = vmul.f32 %v1702, %v1756
        %v1758 = vsub.f32 1.0, %v1757
        %v1759 = vmul.f32 %v1756, %v1758
        %v1760 = vadd.f32 %v1756, %v1759
        %vm1761 = vweird.f32 %v1702
        %vm1762 = vweird.f32 %v1756
        %vm1763 = vmor %vm1761, %vm1762
        %v1764 = vsel %vm1763, %v1756, %v1760
        %v1765 = vand.u32 2147483647, %v1702
        %vm1766 = vcmp.eq.f32.partialorder %v1765, 8.507059e+37
        %v1767 = vand.u32 %v1702, 2147483648
        %v1768 = vor.u32 1.1754944e-38, %v1767
        %v1769 = vsel %vm1766, %v1768, %v1764
        %v1770 = vmul.f32 1.0, %v1769
        %v1771 = vrcp.pop %v1703
        %v1772 = vmul.f32 %v1703, %v1771
        %v1773 = vsub.f32 1.0, %v1772
        %v1774 = vmul.f32 %v1771, %v1773
        %v1775 = vadd.f32 %v1771, %v1774
        %vm1776 = vweird.f32 %v1703
        %vm1777 = vweird.f32 %v1771
        %vm1778 = vmor %vm1776, %vm1777
        %v1779 = vsel %vm1778, %v1771, %v1775
        %v1780 = vand.u32 2147483647, %v1703
        %vm1781 = vcmp.eq.f32.partialorder %v1780, 8.507059e+37
        %v1782 = vand.u32 %v1703, 2147483648
        %v1783 = vor.u32 1.1754944e-38, %v1782
        %v1784 = vsel %vm1781, %v1783, %v1779
        %v1785 = vmul.f32 1.0, %v1784
        %v1786 = vrcp.pop %v1704
        %v1787 = vmul.f32 %v1704, %v1786
        %v1788 = vsub.f32 1.0, %v1787
        %v1789 = vmul.f32 %v1786, %v1788
        %v1790 = vadd.f32 %v1786, %v1789
        %vm1791 = vweird.f32 %v1704
        %vm1792 = vweird.f32 %v1786
        %vm1793 = vmor %vm1791, %vm1792
        %v1794 = vsel %vm1793, %v1786, %v1790
        %v1795 = vand.u32 2147483647, %v1704
        %vm1796 = vcmp.eq.f32.partialorder %v1795, 8.507059e+37
        %v1797 = vand.u32 %v1704, 2147483648
        %v1798 = vor.u32 1.1754944e-38, %v1797
        %v1799 = vsel %vm1796, %v1798, %v1794
        %v1800 = vmul.f32 1.0, %v1799
        %v1801 = vrcp.pop %v1705
        %v1802 = vmul.f32 %v1705, %v1801
        %v1803 = vsub.f32 1.0, %v1802
        %v1804 = vmul.f32 %v1801, %v1803
        %v1805 = vadd.f32 %v1801, %v1804
        %vm1806 = vweird.f32 %v1705
        %vm1807 = vweird.f32 %v1801
        %vm1808 = vmor %vm1806, %vm1807
        %v1809 = vsel %vm1808, %v1801, %v1805
        %v1810 = vand.u32 2147483647, %v1705
        %vm1811 = vcmp.eq.f32.partialorder %v1810, 8.507059e+37
        %v1812 = vand.u32 %v1705, 2147483648
        %v1813 = vor.u32 1.1754944e-38, %v1812
        %v1814 = vsel %vm1811, %v1813, %v1809
        %v1815 = vmul.f32 1.0, %v1814
        %v1816 = vrcp.pop %v1706
        %v1817 = vmul.f32 %v1706, %v1816
        %v1818 = vsub.f32 1.0, %v1817
        %v1819 = vmul.f32 %v1816, %v1818
        %v1820 = vadd.f32 %v1816, %v1819
        %vm1821 = vweird.f32 %v1706
        %vm1822 = vweird.f32 %v1816
        %vm1823 = vmor %vm1821, %vm1822
        %v1824 = vsel %vm1823, %v1816, %v1820
        %v1825 = vand.u32 2147483647, %v1706
        %vm1826 = vcmp.eq.f32.partialorder %v1825, 8.507059e+37
        %v1827 = vand.u32 %v1706, 2147483648
        %v1828 = vor.u32 1.1754944e-38, %v1827
        %v1829 = vsel %vm1826, %v1828, %v1824
        %v1830 = vmul.f32 1.0, %v1829
        %v1831 = vrcp.pop %v1707
        %v1832 = vmul.f32 %v1707, %v1831
        %v1833 = vsub.f32 1.0, %v1832
        %v1834 = vmul.f32 %v1831, %v1833
        %v1835 = vadd.f32 %v1831, %v1834
        %vm1836 = vweird.f32 %v1707
        %vm1837 = vweird.f32 %v1831
        %vm1838 = vmor %vm1836, %vm1837
        %v1839 = vsel %vm1838, %v1831, %v1835
        %v1840 = vand.u32 2147483647, %v1707
        %vm1841 = vcmp.eq.f32.partialorder %v1840, 8.507059e+37
        %v1842 = vand.u32 %v1707, 2147483648
        %v1843 = vor.u32 1.1754944e-38, %v1842
        %v1844 = vsel %vm1841, %v1843, %v1839
        %v1845 = vmul.f32 1.0, %v1844
        %v1846 = vrcp.pop %v1708
        %v1847 = vmul.f32 %v1708, %v1846
        %v1848 = vsub.f32 1.0, %v1847
        %v1849 = vmul.f32 %v1846, %v1848
        %v1850 = vadd.f32 %v1846, %v1849
        %vm1851 = vweird.f32 %v1708
        %vm1852 = vweird.f32 %v1846
        %vm1853 = vmor %vm1851, %vm1852
        %v1854 = vsel %vm1853, %v1846, %v1850
        %v1855 = vand.u32 2147483647, %v1708
        %vm1856 = vcmp.eq.f32.partialorder %v1855, 8.507059e+37
        %v1857 = vand.u32 %v1708, 2147483648
        %v1858 = vor.u32 1.1754944e-38, %v1857
        %v1859 = vsel %vm1856, %v1858, %v1854
        %v1860 = vmul.f32 1.0, %v1859
        %v1861 = vrcp.pop %v1709
        %v1862 = vmul.f32 %v1709, %v1861
        %v1863 = vsub.f32 1.0, %v1862
        %v1864 = vmul.f32 %v1861, %v1863
        %v1865 = vadd.f32 %v1861, %v1864
        %vm1866 = vweird.f32 %v1709
        %vm1867 = vweird.f32 %v1861
        %vm1868 = vmor %vm1866, %vm1867
        %v1869 = vsel %vm1868, %v1861, %v1865
        %v1870 = vand.u32 2147483647, %v1709
        %vm1871 = vcmp.eq.f32.partialorder %v1870, 8.507059e+37
        %v1872 = vand.u32 %v1709, 2147483648
        %v1873 = vor.u32 1.1754944e-38, %v1872
        %v1874 = vsel %vm1871, %v1873, %v1869
        %v1875 = vmul.f32 1.0, %v1874
        %v1876 = vrcp.pop %v1710
        %v1877 = vmul.f32 %v1710, %v1876
        %v1878 = vsub.f32 1.0, %v1877
        %v1879 = vmul.f32 %v1876, %v1878
        %v1880 = vadd.f32 %v1876, %v1879
        %vm1881 = vweird.f32 %v1710
        %vm1882 = vweird.f32 %v1876
        %vm1883 = vmor %vm1881, %vm1882
        %v1884 = vsel %vm1883, %v1876, %v1880
        %v1885 = vand.u32 2147483647, %v1710
        %vm1886 = vcmp.eq.f32.partialorder %v1885, 8.507059e+37
        %v1887 = vand.u32 %v1710, 2147483648
        %v1888 = vor.u32 1.1754944e-38, %v1887
        %v1889 = vsel %vm1886, %v1888, %v1884
        %v1890 = vmul.f32 1.0, %v1889
        %v1891 = vsub.f32 %v1725, %v1598
        %v1892 = vsub.f32 %v1740, %v1616
        %v1893 = vsub.f32 %v1755, %v1634
        %v1894 = vsub.f32 %v1770, %v1652
        %v1895 = vsub.f32 %v1785, %v1600
        %v1896 = vsub.f32 %v1800, %v1618
        %v1897 = vsub.f32 %v1815, %v1636
        %v1898 = vsub.f32 %v1830, %v1654
        %v1899 = vsub.f32 %v1845, %v1603
        %v1900 = vsub.f32 %v1860, %v1621
        %v1901 = vsub.f32 %v1875, %v1639
        %v1902 = vsub.f32 %v1890, %v1657
        %1904 = vset.pattern.permute.xlu0 0
        %1905 = vperm.xlu0 %1904, %v1660
        %v1906 = vpop.permute.xlu0 %1905
        %1909 = vset.pattern.permute.xlu0 0
        %1910 = vperm.xlu0 %1909, %v1661
        %v1911 = vpop.permute.xlu0 %1910
        %1914 = vset.pattern.permute.xlu0 0
        %1915 = vperm.xlu0 %1914, %v1662
        %v1916 = vpop.permute.xlu0 %1915
        %v1918 = vmul.f32 %v1906, %v1891
        %v1919 = vmul.f32 %v1906, %v1892
        %v1920 = vmul.f32 %v1906, %v1893
        %v1921 = vmul.f32 %v1906, %v1894
        %v1922 = vmul.f32 %v1911, %v1895
        %v1923 = vmul.f32 %v1911, %v1896
        %v1924 = vmul.f32 %v1911, %v1897
        %v1925 = vmul.f32 %v1911, %v1898
        %v1926 = vmul.f32 %v1916, %v1899
        %v1927 = vmul.f32 %v1916, %v1900
        %v1928 = vmul.f32 %v1916, %v1901
        %v1929 = vmul.f32 %v1916, %v1902
        %v1930 = vadd.f32 %v1598, %v1918
        %v1931 = vadd.f32 %v1616, %v1919
        %v1932 = vadd.f32 %v1634, %v1920
        %v1933 = vadd.f32 %v1652, %v1921
        %v1934 = vadd.f32 %v1600, %v1922
        %v1935 = vadd.f32 %v1618, %v1923
        %v1936 = vadd.f32 %v1636, %v1924
        %v1937 = vadd.f32 %v1654, %v1925
        %v1938 = vadd.f32 %v1603, %v1926
        %v1939 = vadd.f32 %v1621, %v1927
        %v1940 = vadd.f32 %v1639, %v1928
        %v1941 = vadd.f32 %v1657, %v1929
        %v1942 = vsel %vm640, %v1013, 0.0
        %v1943 = vsel %vm640, %v1031, 0.0
        %v1944 = vsel %vm640, %v1049, 0.0
        %v1945 = vsel %vm640, %v1067, 0.0
        %1946 = vst [vmem:[%s519] sm:$0xff] %v1930
        %1947 = vst [vmem:[%s519 + $0x8] sm:$0xff] %v1931
        %1948 = vst [vmem:[%s519 + $0x10] sm:$0xff] %v1932
        %1949 = vst [vmem:[%s519 + $0x18] sm:$0xff] %v1933
        %1950 = vst [vmem:[%s519 + $0x20] sm:$0xff] %v1934
        %1951 = vst [vmem:[%s519 + $0x28] sm:$0xff] %v1935
        %1952 = vst [vmem:[%s519 + $0x30] sm:$0xff] %v1936
        %1953 = vst [vmem:[%s519 + $0x38] sm:$0xff] %v1937
        %1954 = vst [vmem:[%s519 + $0x40] sm:$0xff] %v1938
        %1955 = vst [vmem:[%s519 + $0x48] sm:$0xff] %v1939
        %1956 = vst [vmem:[%s519 + $0x50] sm:$0xff] %v1940
        %1957 = vst [vmem:[%s519 + $0x58] sm:$0xff] %v1941
        %1958 = vst [vmem:[%s519 + $0x60] sm:$0xff] %v1008
        %1959 = vst [vmem:[%s519 + $0x68] sm:$0xff] %v1026
        %1960 = vst [vmem:[%s519 + $0x70] sm:$0xff] %v1044
        %1961 = vst [vmem:[%s519 + $0x78] sm:$0xff] %v1062
        %1962 = vst [vmem:[%s519 + $0x80] sm:$0xff] %v1010
        %1963 = vst [vmem:[%s519 + $0x88] sm:$0xff] %v1028
        %1964 = vst [vmem:[%s519 + $0x90] sm:$0xff] %v1046
        %1965 = vst [vmem:[%s519 + $0x98] sm:$0xff] %v1064
        %1966 = vst [vmem:[%s519 + $0xa0] sm:$0xff] %v1942
        %1967 = vst [vmem:[%s519 + $0xa8] sm:$0xff] %v1943
        %1968 = vst [vmem:[%s519 + $0xb0] sm:$0xff] %v1944
        %1969 = vst [vmem:[%s519 + $0xb8] sm:$0xff] %v1945
        %s1970 = sand.u32 %s332, 1
        %s1971 = sand.u32 %s332, 1
        %s1972 = smul.addr %s1971, 192
        %s1973 = scalar_lea.vmem [#allocation3], %s1972
        // Predicated region
        $region100: #{vae_forward.1} parent=94 // pred_check
          %p1974 = pneg %p342
        $region101: #{vae_forward.1} parent=94 // pred_check_branch
          %1976 = sbr.rel (%p1974) target = $region103
        $region102: #{vae_forward.1} parent=94 // pred_region
          %s1977 = smul.u32 4, %s25
          %s1978 = smul.addr %s1977, 8
          %s1979 = scalar_lea.vmem %s14, %s1978
          // Predicated region
          $region104: #{vae_forward.1} parent=102 // pred_check
            _
          $region105: #{vae_forward.1} parent=102 // pred_check_branch
            %1981 = sbr.rel (0) target = $region107
          $region106: #{vae_forward.1} parent=102 // pred_region
            // Predicated region
            $region108: #{vae_forward.1} parent=106 // pred_check
              _
            $region109: #{vae_forward.1} parent=106 // pred_check_branch
              %1983 = sbr.rel (0) target = $region111
            $region110: #{vae_forward.1} parent=106 // pred_region
              loop: start=0, step=1, limit=1
              $region112: #{vae_forward.1} parent=110 // loop_pre_header
                _
              $region113: #{vae_forward.1} parent=110 // loop_header
                %s1985 = sphi 0, %s1989
                %p1986 = scmp.ge.s32.totalorder %s1985, 1
                %s1990 = sphi %s1973, %s1973
                %s1991 = sphi %s1979, %s1979
              $region114: #{vae_forward.1} parent=110 // loop_header_branch
                %1988 = sbr.rel (%p1986) target = $region118
              $region115: #{vae_forward.1} parent=110 // loop_body
                %v1992 = vld [vmem:[%s1990] sm:$0xff]
                %1993 = vst [vmem:[%s1991] sm:$0xff] %v1992
                %v1994 = vld [vmem:[%s1990 + $0x8] sm:$0xff]
                %1995 = vst [vmem:[%s1991 + $0x8] sm:$0xff] %v1994
                %v1996 = vld [vmem:[%s1990 + $0x10] sm:$0xff]
                %1997 = vst [vmem:[%s1991 + $0x10] sm:$0xff] %v1996
                %v1998 = vld [vmem:[%s1990 + $0x18] sm:$0xff]
                %1999 = vst [vmem:[%s1991 + $0x18] sm:$0xff] %v1998
                %v2000 = vld [vmem:[%s1990 + $0x20] sm:$0xff]
                %2001 = vst [vmem:[%s1991 + $0x40] sm:$0xff] %v2000
                %v2002 = vld [vmem:[%s1990 + $0x28] sm:$0xff]
                %2003 = vst [vmem:[%s1991 + $0x48] sm:$0xff] %v2002
                %v2004 = vld [vmem:[%s1990 + $0x30] sm:$0xff]
                %2005 = vst [vmem:[%s1991 + $0x50] sm:$0xff] %v2004
                %v2006 = vld [vmem:[%s1990 + $0x38] sm:$0xff]
                %2007 = vst [vmem:[%s1991 + $0x58] sm:$0xff] %v2006
                %v2008 = vld [vmem:[%s1990 + $0x40] sm:$0xff]
                %2009 = vst [vmem:[%s1991 + $0x80] sm:$0xff] %v2008
                %v2010 = vld [vmem:[%s1990 + $0x48] sm:$0xff]
                %2011 = vst [vmem:[%s1991 + $0x88] sm:$0xff] %v2010
                %v2012 = vld [vmem:[%s1990 + $0x50] sm:$0xff]
                %2013 = vst [vmem:[%s1991 + $0x90] sm:$0xff] %v2012
                %v2014 = vld [vmem:[%s1990 + $0x58] sm:$0xff]
                %2015 = vst [vmem:[%s1991 + $0x98] sm:$0xff] %v2014
                %v2016 = vld [vmem:[%s1990 + $0x60] sm:$0xff]
                %2017 = vst [vmem:[%s1991 + $0xc0] sm:$0xff] %v2016
                %v2018 = vld [vmem:[%s1990 + $0x68] sm:$0xff]
                %2019 = vst [vmem:[%s1991 + $0xc8] sm:$0xff] %v2018
                %v2020 = vld [vmem:[%s1990 + $0x70] sm:$0xff]
                %2021 = vst [vmem:[%s1991 + $0xd0] sm:$0xff] %v2020
                %v2022 = vld [vmem:[%s1990 + $0x78] sm:$0xff]
                %2023 = vst [vmem:[%s1991 + $0xd8] sm:$0xff] %v2022
                %v2024 = vld [vmem:[%s1990 + $0x80] sm:$0xff]
                %2025 = vst [vmem:[%s1991 + $0x100] sm:$0xff] %v2024
                %v2026 = vld [vmem:[%s1990 + $0x88] sm:$0xff]
                %2027 = vst [vmem:[%s1991 + $0x108] sm:$0xff] %v2026
                %v2028 = vld [vmem:[%s1990 + $0x90] sm:$0xff]
                %2029 = vst [vmem:[%s1991 + $0x110] sm:$0xff] %v2028
                %v2030 = vld [vmem:[%s1990 + $0x98] sm:$0xff]
                %2031 = vst [vmem:[%s1991 + $0x118] sm:$0xff] %v2030
                %v2032 = vld [vmem:[%s1990 + $0xa0] sm:$0xff]
                %2033 = vst [vmem:[%s1991 + $0x140] sm:$0xff] %v2032
                %v2034 = vld [vmem:[%s1990 + $0xa8] sm:$0xff]
                %2035 = vst [vmem:[%s1991 + $0x148] sm:$0xff] %v2034
                %v2036 = vld [vmem:[%s1990 + $0xb0] sm:$0xff]
                %2037 = vst [vmem:[%s1991 + $0x150] sm:$0xff] %v2036
                %v2038 = vld [vmem:[%s1990 + $0xb8] sm:$0xff]
                %2039 = vst [vmem:[%s1991 + $0x158] sm:$0xff] %v2038
              $region116: #{vae_forward.1} parent=110 // loop_footer
                %s1989 = sadd.s32 1, %s1985
              $region117: #{vae_forward.1} parent=110 // loop_footer_branch
                %1984 = sbr.rel target = $region113
              $region118: #{vae_forward.1} parent=110 // loop_exit
                _
            $region111: #{vae_forward.1} parent=106 // pred_fallthru
              _
            // Predicated region
            $region119: #{vae_forward.1} parent=106 // pred_check
              _
            $region120: #{vae_forward.1} parent=106 // pred_check_branch
              %2041 = sbr.rel target = $region122
            $region121: #{vae_forward.1} parent=106 // pred_region
              _
            $region122: #{vae_forward.1} parent=106 // pred_fallthru
              _
          $region107: #{vae_forward.1} parent=102 // pred_fallthru
            _
          %2042 = vnop
        $region103: #{vae_forward.1} parent=94 // pred_fallthru
          _
      $region95: #{vae_forward.1} parent=5 // pred_fallthru
        _
      %p2043 = scmp.le.s32.totalorder 2, %s20
      // Predicated region
      $region123: #{vae_forward.1} parent=5 // pred_check
        %p2044 = pneg %p2043
      $region124: #{vae_forward.1} parent=5 // pred_check_branch
        %2046 = sbr.rel (%p2044) target = $region126
      $region125: #{vae_forward.1} parent=5 // pred_region
        %s2047 = ssub.s32 %s20, 2
        // Predicated region
        $region127: #{vae_forward.1} parent=125 // pred_check
          %p2048 = pneg %p348
        $region128: #{vae_forward.1} parent=125 // pred_check_branch
          %2050 = sbr.rel (%p2048) target = $region130
        $region129: #{vae_forward.1} parent=125 // pred_region
          %s2051 = sand.u32 %s333, 1
          %s2052 = sand.u32 %s333, 1
          %s2053 = smul.addr %s2052, 192
          %s2054 = scalar_lea.vmem [#allocation3], %s2053
        $region130: #{vae_forward.1} parent=125 // pred_fallthru
          _
      $region126: #{vae_forward.1} parent=5 // pred_fallthru
        _
    $region6: #{vae_forward.1} parent=1 // loop_footer
      %s24 = sadd.s32 1, %s20
    $region7: #{vae_forward.1} parent=1 // loop_footer_branch
      %19 = sbr.rel target = $region3
    $region8: #{vae_forward.1} parent=1 // loop_exit
      _

</llo_original>
